<compile_context>
chip_gen: v5e
topology: v5e:2x2
jax: 0.10.0
libtpu: 0.0.40
codegen_flags: <defaults>
</compile_context>

<pallas_src>
import functools

import jax
import jax.numpy as jnp
from jax.experimental import pallas as pl
from jax.experimental.pallas import tpu as pltpu

BN_EPS = 1e-5  # nn.BatchNorm2d default


# ------------------------------ kernels ------------------------------------ #

def _conv3x3_stats_kernel(x_ref, w_ref, b_ref, h_ref, stats_ref, xp_ref):
    # x_ref    : (1, H, W, C)    one batch element, NHWC
    # w_ref    : (9*C, C)        im2row 3x3 weights, row = (dy*3+dx)*C + ci
    # b_ref    : (1, C)          conv bias
    # h_ref    : (1, H*W, C)     conv3x3(+bias) output, written every step
    # stats_ref: (2, C)          [sum; sum_sq] accumulated over the batch grid
    # xp_ref   : (H+2, W+2, C)   VMEM scratch: zero-padded input
    n = pl.program_id(0)
    Hp2, Wp2, C = xp_ref.shape
    H, W = Hp2 - 2, Wp2 - 2
    HW = H * W

    @pl.when(n == 0)
    def _():
        xp_ref[...] = jnp.zeros_like(xp_ref)        # zero the halo once
        stats_ref[...] = jnp.zeros_like(stats_ref)  # init BN accumulator

    # in-kernel 'same' zero padding (no HBM-side jnp.pad)
    xp_ref[1:H + 1, 1:W + 1, :] = x_ref[0]

    # im2row: 9 shifted taps -> (H*W, 9*C) patch matrix, one MXU contraction
    taps = [xp_ref[dy:dy + H, dx:dx + W, :].reshape(HW, C)
            for dy in range(3) for dx in range(3)]
    patches = jnp.concatenate(taps, axis=1)          # (HW, 9*C)

    h = jnp.dot(patches, w_ref[...], preferred_element_type=jnp.float32)
    h = h + b_ref[...]                               # (HW, C)
    h_ref[0] = h.astype(h_ref.dtype)

    # per-channel sum / sum-of-squares for exact train-mode BatchNorm
    s = jnp.sum(h, axis=0, keepdims=True)            # (1, C)
    ss = jnp.sum(h * h, axis=0, keepdims=True)       # (1, C)
    stats_ref[...] += jnp.concatenate([s, ss], axis=0)


def _bn_relu_conv1x1_kernel(h_ref, stats_ref, gamma_ref, beta_ref,
                            w2_ref, b2_ref, o_ref, *, inv_m):
    # h_ref : (1, H*W, C);  stats_ref: (2, C);  gamma/beta: (1, C)
    # w2_ref: (Cout, C);    b2_ref: (Cout, 1);  o_ref: (1, Cout, H*W)  (NCHW)
    h = h_ref[0]                                     # (HW, C) f32
    mean = stats_ref[0:1, :] * inv_m                 # (1, C)
    var = stats_ref[1:2, :] * inv_m - mean * mean    # biased var (train mode)
    scale = gamma_ref[...] * jax.lax.rsqrt(var + BN_EPS)
    shift = beta_ref[...] - mean * scale
    y = jnp.maximum(h * scale + shift, 0.0)          # BN + ReLU

    # 1x1 conv; produce channel-major (Cout, H*W) -> lane-dense NCHW output
    out = jax.lax.dot_general(w2_ref[...], y,
                              dimension_numbers=(((1,), (1,)), ((), ())),
                              preferred_element_type=jnp.float32)
    o_ref[0] = (out + b2_ref[...]).astype(o_ref.dtype)


# ------------------------------ wrapper ------------------------------------ #

def anchor_free_forward(x_nhwc, params):
    """x_nhwc: (N, H, W, Cin) f32  (= PyTorch NCHW input permuted (0,2,3,1)).
    Returns (N, Cout, H, W) f32 — identical layout to the PyTorch module."""
    N, H, W, C = x_nhwc.shape
    HW = H * W
    w1 = params["w1"].reshape(9 * C, C)      # (3,3,Cin,Cout=Cin) -> (9C, C)
    b1 = params["b1"].reshape(1, C)
    gamma = params["gamma"].reshape(1, C)
    beta = params["beta"].reshape(1, C)
    w2 = params["w2"]                        # (Cout, Cin)
    b2 = params["b2"].reshape(-1, 1)
    Cout = w2.shape[0]

    # pass 1: conv3x3 + bias, accumulate exact BN batch statistics
    h, stats = pl.pallas_call(
        _conv3x3_stats_kernel,
        grid_spec=pltpu.PrefetchScalarGridSpec(
            num_scalar_prefetch=0,
            grid=(N,),
            in_specs=[
                pl.BlockSpec((1, H, W, C), lambda n: (n, 0, 0, 0)),
                pl.BlockSpec((9 * C, C), lambda n: (0, 0)),
                pl.BlockSpec((1, C), lambda n: (0, 0)),
            ],
            out_specs=[
                pl.BlockSpec((1, HW, C), lambda n: (n, 0, 0)),
                pl.BlockSpec((2, C), lambda n: (0, 0)),   # resident accumulator
            ],
            scratch_shapes=[pltpu.VMEM((H + 2, W + 2, C), jnp.float32)],
        ),
        out_shape=(
            jax.ShapeDtypeStruct((N, HW, C), jnp.float32),
            jax.ShapeDtypeStruct((2, C), jnp.float32),
        ),
        compiler_params=pltpu.CompilerParams(
            dimension_semantics=("arbitrary",)),      # BN reduction over batch
    )(x_nhwc, w1, b1)

    # pass 2: BN normalize + ReLU + 1x1 conv, lane-dense NCHW output
    out = pl.pallas_call(
        functools.partial(_bn_relu_conv1x1_kernel, inv_m=1.0 / (N * HW)),
        grid_spec=pltpu.PrefetchScalarGridSpec(
            num_scalar_prefetch=0,
            grid=(N,),
            in_specs=[
                pl.BlockSpec((1, HW, C), lambda n: (n, 0, 0)),
                pl.BlockSpec((2, C), lambda n: (0, 0)),
                pl.BlockSpec((1, C), lambda n: (0, 0)),
                pl.BlockSpec((1, C), lambda n: (0, 0)),
                pl.BlockSpec((Cout, C), lambda n: (0, 0)),
                pl.BlockSpec((Cout, 1), lambda n: (0, 0)),
            ],
            out_specs=pl.BlockSpec((1, Cout, HW), lambda n: (n, 0, 0)),
        ),
        out_shape=jax.ShapeDtypeStruct((N, Cout, HW), jnp.float32),
        compiler_params=pltpu.CompilerParams(
            dimension_semantics=("parallel",)),       # megacore-shardable
    )(h, stats, gamma, beta, w2, b2)

    return out.reshape(N, Cout, H, W)


# ------------------------------ reference ---------------------------------- #

def reference_forward(x_nhwc, params):
    w1 = params["w1"]                                  # (3,3,Cin,Cin) HWIO
    h = jax.lax.conv_general_dilated(
        x_nhwc, w1, window_strides=(1, 1), padding="SAME",
        dimension_numbers=("NHWC", "HWIO", "NHWC")) + params["b1"]
    mean = jnp.mean(h, axis=(0, 1, 2))
    var = jnp.var(h, axis=(0, 1, 2))                   # biased (train mode)
    y = (h - mean) * jax.lax.rsqrt(var + BN_EPS) * params["gamma"] + params["beta"]
    y = jnp.maximum(y, 0.0)
    out = jnp.einsum("nhwc,oc->nhwo", y, params["w2"]) + params["b2"]
    return jnp.transpose(out, (0, 3, 1, 2))            # -> NCHW


# ------------------------------- demo --------------------------------------- #

if __name__ == "__main__":
    key = jax.random.PRNGKey(0)
    N, H, W = 2, 16, 16
    in_channels, out_channels = 128, 16                # lane-dense Cin

    k = jax.random.split(key, 7)
    params = dict(
        w1=0.05 * jax.random.normal(k[0], (3, 3, in_channels, in_channels), jnp.float32),
        b1=0.1 * jax.random.normal(k[1], (in_channels,), jnp.float32),
        gamma=1.0 + 0.1 * jax.random.normal(k[2], (in_channels,), jnp.float32),
        beta=0.1 * jax.random.normal(k[3], (in_channels,), jnp.float32),
        w2=0.05 * jax.random.normal(k[4], (out_channels, in_channels), jnp.float32),
        b2=0.1 * jax.random.normal(k[5], (out_channels,), jnp.float32),
    )
    x = jax.random.normal(k[6], (N, H, W, in_channels), jnp.float32)   # NHWC

    out = jax.block_until_ready(jax.jit(anchor_free_forward)(x, params))
    assert out.shape == (N, out_channels, H, W), out.shape
    assert out.dtype == jnp.float32

    ref = jax.block_until_ready(reference_forward(x, params))
    assert jnp.allclose(out, ref, atol=3e-2, rtol=3e-2), \
        float(jnp.max(jnp.abs(out - ref)))
    print("KERNEL_OK")
</pallas_src>

<mosaic_0001>
module attributes {stable_mosaic.version = 11 : i64} {
  func.func @_bn_relu_conv1x1_kernel(%arg0: i32, %arg1: memref<1x256x128xf32, #tpu.memory_space<vmem>>, %arg2: memref<2x128xf32, #tpu.memory_space<vmem>>, %arg3: memref<1x128xf32, #tpu.memory_space<vmem>>, %arg4: memref<1x128xf32, #tpu.memory_space<vmem>>, %arg5: memref<16x128xf32, #tpu.memory_space<vmem>>, %arg6: memref<16x1xf32, #tpu.memory_space<vmem>>, %arg7: memref<1x16x256xf32, #tpu.memory_space<vmem>>) attributes {dimension_semantics = [#tpu.dimension_semantics<parallel>], iteration_bounds = array<i64: 2>, scalar_prefetch = 0 : i64, scratch_operands = 0 : i64, tpu.core_type = #tpu.core_type<tc>, window_params = [{transform_indices = @transform_0, window_bounds = array<i64: 1, 256, 128>}, {pipeline_mode = #tpu.pipeline_mode<synchronous>, transform_indices = @transform_1, window_bounds = array<i64: 2, 128>}, {pipeline_mode = #tpu.pipeline_mode<synchronous>, transform_indices = @transform_2, window_bounds = array<i64: 1, 128>}, {pipeline_mode = #tpu.pipeline_mode<synchronous>, transform_indices = @transform_3, window_bounds = array<i64: 1, 128>}, {pipeline_mode = #tpu.pipeline_mode<synchronous>, transform_indices = @transform_4, window_bounds = array<i64: 16, 128>}, {pipeline_mode = #tpu.pipeline_mode<synchronous>, transform_indices = @transform_5, window_bounds = array<i64: 16, 1>}, {transform_indices = @transform_6, window_bounds = array<i64: 1, 16, 256>}]} {
    %c0 = arith.constant 0 : index
    %c0_0 = arith.constant 0 : index
    %c0_1 = arith.constant 0 : index
    %0 = vector.load %arg1[%c0, %c0_0, %c0_1] : memref<1x256x128xf32, #tpu.memory_space<vmem>>, vector<1x256x128xf32>
    %1 = vector.shape_cast %0 : vector<1x256x128xf32> to vector<256x128xf32>
    %c0_2 = arith.constant 0 : index
    %c0_3 = arith.constant 0 : index
    %2 = vector.load %arg2[%c0_2, %c0_3] : memref<2x128xf32, #tpu.memory_space<vmem>>, vector<1x128xf32>
    %cst = arith.constant 0.001953125 : f32
    %3 = vector.broadcast %cst : f32 to vector<1x128xf32>
    %4 = arith.mulf %2, %3 : vector<1x128xf32>
    %c1 = arith.constant 1 : index
    %c0_4 = arith.constant 0 : index
    %5 = vector.load %arg2[%c1, %c0_4] : memref<2x128xf32, #tpu.memory_space<vmem>>, vector<1x128xf32>
    %cst_5 = arith.constant 0.001953125 : f32
    %6 = vector.broadcast %cst_5 : f32 to vector<1x128xf32>
    %7 = arith.mulf %5, %6 : vector<1x128xf32>
    %8 = arith.mulf %4, %4 : vector<1x128xf32>
    %9 = arith.subf %7, %8 : vector<1x128xf32>
    %c0_6 = arith.constant 0 : index
    %c0_7 = arith.constant 0 : index
    %10 = vector.load %arg3[%c0_6, %c0_7] : memref<1x128xf32, #tpu.memory_space<vmem>>, vector<1x128xf32>
    %cst_8 = arith.constant 9.99999974E-6 : f32
    %11 = vector.broadcast %cst_8 : f32 to vector<1x128xf32>
    %12 = arith.addf %9, %11 : vector<1x128xf32>
    %13 = math.rsqrt %12 : vector<1x128xf32>
    %14 = arith.mulf %10, %13 : vector<1x128xf32>
    %c0_9 = arith.constant 0 : index
    %c0_10 = arith.constant 0 : index
    %15 = vector.load %arg4[%c0_9, %c0_10] : memref<1x128xf32, #tpu.memory_space<vmem>>, vector<1x128xf32>
    %16 = arith.mulf %4, %14 : vector<1x128xf32>
    %17 = arith.subf %15, %16 : vector<1x128xf32>
    %18 = vector.broadcast %14 : vector<1x128xf32> to vector<256x128xf32>
    %19 = arith.mulf %1, %18 : vector<256x128xf32>
    %20 = vector.broadcast %17 : vector<1x128xf32> to vector<256x128xf32>
    %21 = arith.addf %19, %20 : vector<256x128xf32>
    %cst_11 = arith.constant 0.000000e+00 : f32
    %22 = vector.broadcast %cst_11 : f32 to vector<256x128xf32>
    %23 = arith.maximumf %21, %22 : vector<256x128xf32>
    %c0_12 = arith.constant 0 : index
    %c0_13 = arith.constant 0 : index
    %24 = vector.load %arg5[%c0_12, %c0_13] : memref<16x128xf32, #tpu.memory_space<vmem>>, vector<16x128xf32>
    %cst_14 = arith.constant dense<0.000000e+00> : vector<16x256xf32>
    %25 = tpu.matmul %24, %23, %cst_14 {dimension_numbers = #tpu.dot_dimension_numbers<[1], [1], [0], [0], [0, 0, 1, 0], [], []>} : vector<16x128xf32>, vector<256x128xf32>, vector<16x256xf32> -> vector<16x256xf32>
    %c0_15 = arith.constant 0 : index
    %c0_16 = arith.constant 0 : index
    %26 = vector.load %arg6[%c0_15, %c0_16] : memref<16x1xf32, #tpu.memory_space<vmem>>, vector<16x1xf32>
    %27 = vector.broadcast %26 : vector<16x1xf32> to vector<16x256xf32>
    %28 = arith.addf %25, %27 : vector<16x256xf32>
    %c0_17 = arith.constant 0 : index
    %c0_18 = arith.constant 0 : index
    %c0_19 = arith.constant 0 : index
    %29 = vector.load %arg7[%c0_17, %c0_18, %c0_19] : memref<1x16x256xf32, #tpu.memory_space<vmem>>, vector<1x16x256xf32>
    %30 = vector.shape_cast %29 : vector<1x16x256xf32> to vector<16x256xf32>
    %31 = vector.shape_cast %28 : vector<16x256xf32> to vector<1x16x256xf32>
    tpu.vector_store %arg7[%c0_17, %c0_18, %c0_19], %31 {strides = array<i32>} : memref<1x16x256xf32, #tpu.memory_space<vmem>>, vector<1x16x256xf32>,
    return
  }
  func.func @transform_0(%arg0: i32) -> (i32, i32, i32) {
    %c0_i32 = arith.constant 0 : i32
    %c0_i32_0 = arith.constant 0 : i32
    %c0_i32_1 = arith.constant 0 : i32
    return %arg0, %c0_i32, %c0_i32_0 : i32, i32, i32
  }
  func.func @transform_1(%arg0: i32) -> (i32, i32) {
    %c0_i32 = arith.constant 0 : i32
    %c0_i32_0 = arith.constant 0 : i32
    %c0_i32_1 = arith.constant 0 : i32
    return %c0_i32, %c0_i32_0 : i32, i32
  }
  func.func @transform_2(%arg0: i32) -> (i32, i32) {
    %c0_i32 = arith.constant 0 : i32
    %c0_i32_0 = arith.constant 0 : i32
    %c0_i32_1 = arith.constant 0 : i32
    return %c0_i32, %c0_i32_0 : i32, i32
  }
  func.func @transform_3(%arg0: i32) -> (i32, i32) {
    %c0_i32 = arith.constant 0 : i32
    %c0_i32_0 = arith.constant 0 : i32
    %c0_i32_1 = arith.constant 0 : i32
    return %c0_i32, %c0_i32_0 : i32, i32
  }
  func.func @transform_4(%arg0: i32) -> (i32, i32) {
    %c0_i32 = arith.constant 0 : i32
    %c0_i32_0 = arith.constant 0 : i32
    %c0_i32_1 = arith.constant 0 : i32
    return %c0_i32, %c0_i32_0 : i32, i32
  }
  func.func @transform_5(%arg0: i32) -> (i32, i32) {
    %c0_i32 = arith.constant 0 : i32
    %c0_i32_0 = arith.constant 0 : i32
    %c0_i32_1 = arith.constant 0 : i32
    return %c0_i32, %c0_i32_0 : i32, i32
  }
  func.func @transform_6(%arg0: i32) -> (i32, i32, i32) {
    %c0_i32 = arith.constant 0 : i32
    %c0_i32_0 = arith.constant 0 : i32
    %c0_i32_1 = arith.constant 0 : i32
    return %arg0, %c0_i32, %c0_i32_0 : i32, i32, i32
  }
}

module attributes {stable_mosaic.version = 11 : i64} {
  func.func @_conv3x3_stats_kernel(%arg0: i32, %arg1: memref<1x16x16x128xf32, #tpu.memory_space<vmem>>, %arg2: memref<1152x128xf32, #tpu.memory_space<vmem>>, %arg3: memref<1x128xf32, #tpu.memory_space<vmem>>, %arg4: memref<1x256x128xf32, #tpu.memory_space<vmem>>, %arg5: memref<2x128xf32, #tpu.memory_space<vmem>>, %arg6: memref<18x18x128xf32, #tpu.memory_space<vmem>>) attributes {dimension_semantics = [#tpu.dimension_semantics<arbitrary>], iteration_bounds = array<i64: 2>, scalar_prefetch = 0 : i64, scratch_operands = 1 : i64, tpu.core_type = #tpu.core_type<tc>, window_params = [{transform_indices = @transform_0, window_bounds = array<i64: 1, 16, 16, 128>}, {pipeline_mode = #tpu.pipeline_mode<synchronous>, transform_indices = @transform_1, window_bounds = array<i64: 1152, 128>}, {pipeline_mode = #tpu.pipeline_mode<synchronous>, transform_indices = @transform_2, window_bounds = array<i64: 1, 128>}, {transform_indices = @transform_3, window_bounds = array<i64: 1, 256, 128>}, {pipeline_mode = #tpu.pipeline_mode<synchronous>, transform_indices = @transform_4, window_bounds = array<i64: 2, 128>}]} {
    %c0_i32 = arith.constant 0 : i32
    %0 = arith.cmpi eq, %arg0, %c0_i32 : i32
    %1 = arith.extui %0 : i1 to i32
    %c0_i32_0 = arith.constant 0 : i32
    %2 = arith.cmpi ne, %1, %c0_i32_0 : i32
    scf.if %2 {
      %cst_45 = arith.constant 0.000000e+00 : f32
      %42 = vector.broadcast %cst_45 : f32 to vector<18x18x128xf32>
      %c0_46 = arith.constant 0 : index
      %c0_47 = arith.constant 0 : index
      %c0_48 = arith.constant 0 : index
      %43 = vector.load %arg6[%c0_46, %c0_47, %c0_48] : memref<18x18x128xf32, #tpu.memory_space<vmem>>, vector<18x18x128xf32>
      tpu.vector_store %arg6[%c0_46, %c0_47, %c0_48], %42 {strides = array<i32>} : memref<18x18x128xf32, #tpu.memory_space<vmem>>, vector<18x18x128xf32>,
      %cst_49 = arith.constant 0.000000e+00 : f32
      %44 = vector.broadcast %cst_49 : f32 to vector<2x128xf32>
      %c0_50 = arith.constant 0 : index
      %c0_51 = arith.constant 0 : index
      %45 = vector.load %arg5[%c0_50, %c0_51] : memref<2x128xf32, #tpu.memory_space<vmem>>, vector<2x128xf32>
      tpu.vector_store %arg5[%c0_50, %c0_51], %44 {strides = array<i32>} : memref<2x128xf32, #tpu.memory_space<vmem>>, vector<2x128xf32>,
    } else {
    }
    %c0 = arith.constant 0 : index
    %c0_1 = arith.constant 0 : index
    %c0_2 = arith.constant 0 : index
    %c0_3 = arith.constant 0 : index
    %3 = vector.load %arg1[%c0, %c0_1, %c0_2, %c0_3] : memref<1x16x16x128xf32, #tpu.memory_space<vmem>>, vector<1x16x16x128xf32>
    %4 = vector.shape_cast %3 : vector<1x16x16x128xf32> to vector<16x16x128xf32>
    %c1 = arith.constant 1 : index
    %c1_4 = arith.constant 1 : index
    %c0_5 = arith.constant 0 : index
    %5 = vector.load %arg6[%c1, %c1_4, %c0_5] : memref<18x18x128xf32, #tpu.memory_space<vmem>>, vector<16x16x128xf32>
    tpu.vector_store %arg6[%c1, %c1_4, %c0_5], %4 {strides = array<i32>} : memref<18x18x128xf32, #tpu.memory_space<vmem>>, vector<16x16x128xf32>,
    %c0_6 = arith.constant 0 : index
    %c0_7 = arith.constant 0 : index
    %c0_8 = arith.constant 0 : index
    %6 = vector.load %arg6[%c0_6, %c0_7, %c0_8] : memref<18x18x128xf32, #tpu.memory_space<vmem>>, vector<16x16x128xf32>
    %7 = vector.shape_cast %6 : vector<16x16x128xf32> to vector<256x128xf32>
    %c0_9 = arith.constant 0 : index
    %c1_10 = arith.constant 1 : index
    %c0_11 = arith.constant 0 : index
    %8 = vector.load %arg6[%c0_9, %c1_10, %c0_11] : memref<18x18x128xf32, #tpu.memory_space<vmem>>, vector<16x16x128xf32>
    %9 = vector.shape_cast %8 : vector<16x16x128xf32> to vector<256x128xf32>
    %c0_12 = arith.constant 0 : index
    %c2 = arith.constant 2 : index
    %c0_13 = arith.constant 0 : index
    %10 = vector.load %arg6[%c0_12, %c2, %c0_13] : memref<18x18x128xf32, #tpu.memory_space<vmem>>, vector<16x16x128xf32>
    %11 = vector.shape_cast %10 : vector<16x16x128xf32> to vector<256x128xf32>
    %c1_14 = arith.constant 1 : index
    %c0_15 = arith.constant 0 : index
    %c0_16 = arith.constant 0 : index
    %12 = vector.load %arg6[%c1_14, %c0_15, %c0_16] : memref<18x18x128xf32, #tpu.memory_space<vmem>>, vector<16x16x128xf32>
    %13 = vector.shape_cast %12 : vector<16x16x128xf32> to vector<256x128xf32>
    %c1_17 = arith.constant 1 : index
    %c1_18 = arith.constant 1 : index
    %c0_19 = arith.constant 0 : index
    %14 = vector.load %arg6[%c1_17, %c1_18, %c0_19] : memref<18x18x128xf32, #tpu.memory_space<vmem>>, vector<16x16x128xf32>
    %15 = vector.shape_cast %14 : vector<16x16x128xf32> to vector<256x128xf32>
    %c1_20 = arith.constant 1 : index
    %c2_21 = arith.constant 2 : index
    %c0_22 = arith.constant 0 : index
    %16 = vector.load %arg6[%c1_20, %c2_21, %c0_22] : memref<18x18x128xf32, #tpu.memory_space<vmem>>, vector<16x16x128xf32>
    %17 = vector.shape_cast %16 : vector<16x16x128xf32> to vector<256x128xf32>
    %c2_23 = arith.constant 2 : index
    %c0_24 = arith.constant 0 : index
    %c0_25 = arith.constant 0 : index
    %18 = vector.load %arg6[%c2_23, %c0_24, %c0_25] : memref<18x18x128xf32, #tpu.memory_space<vmem>>, vector<16x16x128xf32>
    %19 = vector.shape_cast %18 : vector<16x16x128xf32> to vector<256x128xf32>
    %c2_26 = arith.constant 2 : index
    %c1_27 = arith.constant 1 : index
    %c0_28 = arith.constant 0 : index
    %20 = vector.load %arg6[%c2_26, %c1_27, %c0_28] : memref<18x18x128xf32, #tpu.memory_space<vmem>>, vector<16x16x128xf32>
    %21 = vector.shape_cast %20 : vector<16x16x128xf32> to vector<256x128xf32>
    %c2_29 = arith.constant 2 : index
    %c2_30 = arith.constant 2 : index
    %c0_31 = arith.constant 0 : index
    %22 = vector.load %arg6[%c2_29, %c2_30, %c0_31] : memref<18x18x128xf32, #tpu.memory_space<vmem>>, vector<16x16x128xf32>
    %23 = vector.shape_cast %22 : vector<16x16x128xf32> to vector<256x128xf32>
    %24 = tpu.concatenate %7, %9, %11, %13, %15, %17, %19, %21, %23 in 1 : vector<256x128xf32>, vector<256x128xf32>, vector<256x128xf32>, vector<256x128xf32>, vector<256x128xf32>, vector<256x128xf32>, vector<256x128xf32>, vector<256x128xf32>, vector<256x128xf32> -> vector<256x1152xf32>
    %c0_32 = arith.constant 0 : index
    %c0_33 = arith.constant 0 : index
    %25 = vector.load %arg2[%c0_32, %c0_33] : memref<1152x128xf32, #tpu.memory_space<vmem>>, vector<1152x128xf32>
    %cst = arith.constant dense<0.000000e+00> : vector<256x128xf32>
    %26 = tpu.matmul %24, %25, %cst {dimension_numbers = #tpu.dot_dimension_numbers<[1], [0], [0], [1], [0, 0, 1, 1], [], []>} : vector<256x1152xf32>, vector<1152x128xf32>, vector<256x128xf32> -> vector<256x128xf32>
    %c0_34 = arith.constant 0 : index
    %c0_35 = arith.constant 0 : index
    %27 = vector.load %arg3[%c0_34, %c0_35] : memref<1x128xf32, #tpu.memory_space<vmem>>, vector<1x128xf32>
    %28 = vector.broadcast %27 : vector<1x128xf32> to vector<256x128xf32>
    %29 = arith.addf %26, %28 : vector<256x128xf32>
    %c0_36 = arith.constant 0 : index
    %c0_37 = arith.constant 0 : index
    %c0_38 = arith.constant 0 : index
    %30 = vector.load %arg4[%c0_36, %c0_37, %c0_38] : memref<1x256x128xf32, #tpu.memory_space<vmem>>, vector<1x256x128xf32>
    %31 = vector.shape_cast %30 : vector<1x256x128xf32> to vector<256x128xf32>
    %32 = vector.shape_cast %29 : vector<256x128xf32> to vector<1x256x128xf32>
    tpu.vector_store %arg4[%c0_36, %c0_37, %c0_38], %32 {strides = array<i32>} : memref<1x256x128xf32, #tpu.memory_space<vmem>>, vector<1x256x128xf32>,
    %cst_39 = arith.constant dense<0.000000e+00> : vector<128xf32>
    %33 = vector.multi_reduction <add>, %29, %cst_39 [0] : vector<256x128xf32> to vector<128xf32>
    %34 = vector.shape_cast %33 : vector<128xf32> to vector<1x128xf32>
    %35 = arith.mulf %29, %29 : vector<256x128xf32>
    %cst_40 = arith.constant dense<0.000000e+00> : vector<128xf32>
    %36 = vector.multi_reduction <add>, %35, %cst_40 [0] : vector<256x128xf32> to vector<128xf32>
    %37 = vector.shape_cast %36 : vector<128xf32> to vector<1x128xf32>
    %c0_41 = arith.constant 0 : index
    %c0_42 = arith.constant 0 : index
    %38 = vector.load %arg5[%c0_41, %c0_42] : memref<2x128xf32, #tpu.memory_space<vmem>>, vector<2x128xf32>
    %39 = tpu.concatenate %34, %37 in 0 : vector<1x128xf32>, vector<1x128xf32> -> vector<2x128xf32>
    %40 = arith.addf %38, %39 : vector<2x128xf32>
    %c0_43 = arith.constant 0 : index
    %c0_44 = arith.constant 0 : index
    %41 = vector.load %arg5[%c0_43, %c0_44] : memref<2x128xf32, #tpu.memory_space<vmem>>, vector<2x128xf32>
    tpu.vector_store %arg5[%c0_43, %c0_44], %40 {strides = array<i32>} : memref<2x128xf32, #tpu.memory_space<vmem>>, vector<2x128xf32>,
    return
  }
  func.func @transform_0(%arg0: i32) -> (i32, i32, i32, i32) {
    %c0_i32 = arith.constant 0 : i32
    %c0_i32_0 = arith.constant 0 : i32
    %c0_i32_1 = arith.constant 0 : i32
    %c0_i32_2 = arith.constant 0 : i32
    return %arg0, %c0_i32, %c0_i32_0, %c0_i32_1 : i32, i32, i32, i32
  }
  func.func @transform_1(%arg0: i32) -> (i32, i32) {
    %c0_i32 = arith.constant 0 : i32
    %c0_i32_0 = arith.constant 0 : i32
    %c0_i32_1 = arith.constant 0 : i32
    return %c0_i32, %c0_i32_0 : i32, i32
  }
  func.func @transform_2(%arg0: i32) -> (i32, i32) {
    %c0_i32 = arith.constant 0 : i32
    %c0_i32_0 = arith.constant 0 : i32
    %c0_i32_1 = arith.constant 0 : i32
    return %c0_i32, %c0_i32_0 : i32, i32
  }
  func.func @transform_3(%arg0: i32) -> (i32, i32, i32) {
    %c0_i32 = arith.constant 0 : i32
    %c0_i32_0 = arith.constant 0 : i32
    %c0_i32_1 = arith.constant 0 : i32
    return %arg0, %c0_i32, %c0_i32_0 : i32, i32, i32
  }
  func.func @transform_4(%arg0: i32) -> (i32, i32) {
    %c0_i32 = arith.constant 0 : i32
    %c0_i32_0 = arith.constant 0 : i32
    %c0_i32_1 = arith.constant 0 : i32
    return %c0_i32, %c0_i32_0 : i32, i32
  }
}

</mosaic_0001>

<llo_original>
// kernel: anchor_free_forward.3
$region0: #{anchor_free_forward.3}
  #allocation0 [shape = 'u32[]', space=smem, size = 0x4, offset = 0x4, fixed_abs, tag = 'smem constant byte address 0x4 - core index']
  #allocation1 [shape = 'u32[72,128]{1,0:T(1,128)}', space=vmem, size = 0x9000, scoped, tag = 'internal scratch']
  %s0 = inlined_call_operand.vmem [shape: f32[2,256,128], index: 0, kind: input, shape index: {}]
  %s1 = inlined_call_operand.vmem [shape: f32[2,128], index: 1, kind: input, shape index: {}]
  %s2 = inlined_call_operand.vmem [shape: f32[1,128], index: 2, kind: input, shape index: {}]
  %s3 = inlined_call_operand.vmem [shape: f32[1,128], index: 3, kind: input, shape index: {}]
  %s4 = inlined_call_operand.vmem [shape: f32[16,128], index: 4, kind: input, shape index: {}]
  %s5 = inlined_call_operand.vmem [shape: f32[16,1], index: 5, kind: input, shape index: {}]
  %s6 = inlined_call_operand.vmem [shape: f32[2,16,256], index: 6, kind: output, shape index: {}]
  %s7 = sld [smem:[#allocation0]]
  $region57: #{anchor_free_forward.3} parent=0
    _
  %s9 = ssub.s32 1, %s7
  %s10 = scalar_select 0, %s9, %s7
  loop: start=0, step=1, limit=4
  $region2: #{anchor_free_forward.3} parent=0 // loop_pre_header
    _
  $region3: #{anchor_free_forward.3} parent=0 // loop_header
    %s12 = sphi 0, %s16
    %p13 = scmp.ge.s32.totalorder %s12, 4
    %s22 = sphi 0, %s24
    %s25 = sphi 0, %s22
    %s26 = sphi 0, %s25
    %s42 = sphi 0, %s26
    %s46 = sphi 0, %s46
    %s48 = sphi 0, %s46
    %s49 = sphi 0, %s48
    %s63 = sphi 0, %s49
    %s67 = sphi 0, %s67
    %s69 = sphi 0, %s67
    %s70 = sphi 0, %s69
    %s84 = sphi 0, %s70
    %s88 = sphi 0, %s88
    %s90 = sphi 0, %s88
    %s91 = sphi 0, %s90
    %s105 = sphi 0, %s91
    %s109 = sphi 0, %s109
    %s111 = sphi 0, %s109
    %s112 = sphi 0, %s111
    %s126 = sphi 0, %s112
    %s130 = sphi 0, %s130
    %s132 = sphi 0, %s130
    %s133 = sphi 0, %s132
    %s147 = sphi 0, %s133
    %s153 = sphi 0, %s155
    %s156 = sphi 0, %s153
    %s157 = sphi 0, %s156
    %s173 = sphi 0, %s157
  $region4: #{anchor_free_forward.3} parent=0 // loop_header_branch
    %15 = sbr.rel (%p13) target = $region8
  $region5: #{anchor_free_forward.3} parent=0 // loop_body
    %s17 = ssub.s32 %s12, 1
    %s18 = ssub.s32 %s12, 2
    %s19 = sadd.s32 %s12, 1
    %s20 = ssub.s32 %s12, %s19
    %p21 = scmp.eq.s32.totalorder %s20, 0
    %s23 = sadd.s32 %s22, 1
    %s24 = scalar_select %p21, %s22, %s23
    %p27 = pneg %p21
    %p28 = scmp.eq.s32.totalorder %s12, 1
    %p29 = por %p27, %p28
    %p30 = scmp.ne.s32.totalorder %s22, %s25
    %p31 = scmp.eq.s32.totalorder %s12, 0
    %p32 = por %p30, %p31
    %p33 = scmp.ne.s32.totalorder %s22, %s25
    %p34 = scmp.eq.s32.totalorder %s17, 1
    %p35 = por %p33, %p34
    %p36 = scmp.ne.s32.totalorder %s25, %s26
    %p37 = scmp.eq.s32.totalorder %s17, 0
    %p38 = por %p36, %p37
    %p39 = scmp.ne.s32.totalorder %s25, %s26
    %p40 = scmp.eq.s32.totalorder %s18, 1
    %p41 = por %p39, %p40
    %p43 = scmp.ne.s32.totalorder %s26, %s42
    %p44 = scmp.eq.s32.totalorder %s18, 0
    %p45 = por %p43, %p44
    %s47 = sadd.s32 %s46, 1
    %p50 = scmp.eq.s32.totalorder %s12, 1
    %p51 = scmp.ne.s32.totalorder %s46, %s48
    %p52 = scmp.eq.s32.totalorder %s12, 0
    %p53 = por %p51, %p52
    %p54 = scmp.ne.s32.totalorder %s46, %s48
    %p55 = scmp.eq.s32.totalorder %s17, 1
    %p56 = por %p54, %p55
    %p57 = scmp.ne.s32.totalorder %s48, %s49
    %p58 = scmp.eq.s32.totalorder %s17, 0
    %p59 = por %p57, %p58
    %p60 = scmp.ne.s32.totalorder %s48, %s49
    %p61 = scmp.eq.s32.totalorder %s18, 1
    %p62 = por %p60, %p61
    %p64 = scmp.ne.s32.totalorder %s49, %s63
    %p65 = scmp.eq.s32.totalorder %s18, 0
    %p66 = por %p64, %p65
    %s68 = sadd.s32 %s67, 1
    %p71 = scmp.eq.s32.totalorder %s12, 1
    %p72 = scmp.ne.s32.totalorder %s67, %s69
    %p73 = scmp.eq.s32.totalorder %s12, 0
    %p74 = por %p72, %p73
    %p75 = scmp.ne.s32.totalorder %s67, %s69
    %p76 = scmp.eq.s32.totalorder %s17, 1
    %p77 = por %p75, %p76
    %p78 = scmp.ne.s32.totalorder %s69, %s70
    %p79 = scmp.eq.s32.totalorder %s17, 0
    %p80 = por %p78, %p79
    %p81 = scmp.ne.s32.totalorder %s69, %s70
    %p82 = scmp.eq.s32.totalorder %s18, 1
    %p83 = por %p81, %p82
    %p85 = scmp.ne.s32.totalorder %s70, %s84
    %p86 = scmp.eq.s32.totalorder %s18, 0
    %p87 = por %p85, %p86
    %s89 = sadd.s32 %s88, 1
    %p92 = scmp.eq.s32.totalorder %s12, 1
    %p93 = scmp.ne.s32.totalorder %s88, %s90
    %p94 = scmp.eq.s32.totalorder %s12, 0
    %p95 = por %p93, %p94
    %p96 = scmp.ne.s32.totalorder %s88, %s90
    %p97 = scmp.eq.s32.totalorder %s17, 1
    %p98 = por %p96, %p97
    %p99 = scmp.ne.s32.totalorder %s90, %s91
    %p100 = scmp.eq.s32.totalorder %s17, 0
    %p101 = por %p99, %p100
    %p102 = scmp.ne.s32.totalorder %s90, %s91
    %p103 = scmp.eq.s32.totalorder %s18, 1
    %p104 = por %p102, %p103
    %p106 = scmp.ne.s32.totalorder %s91, %s105
    %p107 = scmp.eq.s32.totalorder %s18, 0
    %p108 = por %p106, %p107
    %s110 = sadd.s32 %s109, 1
    %p113 = scmp.eq.s32.totalorder %s12, 1
    %p114 = scmp.ne.s32.totalorder %s109, %s111
    %p115 = scmp.eq.s32.totalorder %s12, 0
    %p116 = por %p114, %p115
    %p117 = scmp.ne.s32.totalorder %s109, %s111
    %p118 = scmp.eq.s32.totalorder %s17, 1
    %p119 = por %p117, %p118
    %p120 = scmp.ne.s32.totalorder %s111, %s112
    %p121 = scmp.eq.s32.totalorder %s17, 0
    %p122 = por %p120, %p121
    %p123 = scmp.ne.s32.totalorder %s111, %s112
    %p124 = scmp.eq.s32.totalorder %s18, 1
    %p125 = por %p123, %p124
    %p127 = scmp.ne.s32.totalorder %s112, %s126
    %p128 = scmp.eq.s32.totalorder %s18, 0
    %p129 = por %p127, %p128
    %s131 = sadd.s32 %s130, 1
    %p134 = scmp.eq.s32.totalorder %s12, 1
    %p135 = scmp.ne.s32.totalorder %s130, %s132
    %p136 = scmp.eq.s32.totalorder %s12, 0
    %p137 = por %p135, %p136
    %p138 = scmp.ne.s32.totalorder %s130, %s132
    %p139 = scmp.eq.s32.totalorder %s17, 1
    %p140 = por %p138, %p139
    %p141 = scmp.ne.s32.totalorder %s132, %s133
    %p142 = scmp.eq.s32.totalorder %s17, 0
    %p143 = por %p141, %p142
    %p144 = scmp.ne.s32.totalorder %s132, %s133
    %p145 = scmp.eq.s32.totalorder %s18, 1
    %p146 = por %p144, %p145
    %p148 = scmp.ne.s32.totalorder %s133, %s147
    %p149 = scmp.eq.s32.totalorder %s18, 0
    %p150 = por %p148, %p149
    %s151 = ssub.s32 %s12, %s19
    %p152 = scmp.eq.s32.totalorder %s151, 0
    %s154 = sadd.s32 %s153, 1
    %s155 = scalar_select %p152, %s153, %s154
    %p158 = pneg %p152
    %p159 = scmp.eq.s32.totalorder %s12, 1
    %p160 = por %p158, %p159
    %p161 = scmp.ne.s32.totalorder %s153, %s156
    %p162 = scmp.eq.s32.totalorder %s12, 0
    %p163 = por %p161, %p162
    %p164 = scmp.ne.s32.totalorder %s153, %s156
    %p165 = scmp.eq.s32.totalorder %s17, 1
    %p166 = por %p164, %p165
    %p167 = scmp.ne.s32.totalorder %s156, %s157
    %p168 = scmp.eq.s32.totalorder %s17, 0
    %p169 = por %p167, %p168
    %p170 = scmp.ne.s32.totalorder %s156, %s157
    %p171 = scmp.eq.s32.totalorder %s18, 1
    %p172 = por %p170, %p171
    %p174 = scmp.ne.s32.totalorder %s157, %s173
    %p175 = scmp.eq.s32.totalorder %s18, 0
    %p176 = por %p174, %p175
    %p177 = scmp.le.s32.totalorder 1, %s12
    %p178 = scmp.lt.s32.totalorder %s12, 3
    %p179 = pnand %p177, %p178
    %p180 = pneg %p179
    // Predicated region
    $region9: #{anchor_free_forward.3} parent=5 // pred_check
      _
    $region10: #{anchor_free_forward.3} parent=5 // pred_check_branch
      %182 = sbr.rel (%p179) target = $region12
    $region11: #{anchor_free_forward.3} parent=5 // pred_region
      %s183 = ssub.s32 %s12, 1
      // Predicated region
      $region13: #{anchor_free_forward.3} parent=11 // pred_check
        %p184 = pneg %p59
      $region14: #{anchor_free_forward.3} parent=11 // pred_check_branch
        %186 = sbr.rel (%p184) target = $region16
      $region15: #{anchor_free_forward.3} parent=11 // pred_region
        _
      $region16: #{anchor_free_forward.3} parent=11 // pred_fallthru
        _
      // Predicated region
      $region17: #{anchor_free_forward.3} parent=11 // pred_check
        %p187 = pneg %p80
      $region18: #{anchor_free_forward.3} parent=11 // pred_check_branch
        %189 = sbr.rel (%p187) target = $region20
      $region19: #{anchor_free_forward.3} parent=11 // pred_region
        _
      $region20: #{anchor_free_forward.3} parent=11 // pred_fallthru
        _
      // Predicated region
      $region21: #{anchor_free_forward.3} parent=11 // pred_check
        %p190 = pneg %p101
      $region22: #{anchor_free_forward.3} parent=11 // pred_check_branch
        %192 = sbr.rel (%p190) target = $region24
      $region23: #{anchor_free_forward.3} parent=11 // pred_region
        _
      $region24: #{anchor_free_forward.3} parent=11 // pred_fallthru
        _
      // Predicated region
      $region25: #{anchor_free_forward.3} parent=11 // pred_check
        %p193 = pneg %p122
      $region26: #{anchor_free_forward.3} parent=11 // pred_check_branch
        %195 = sbr.rel (%p193) target = $region28
      $region27: #{anchor_free_forward.3} parent=11 // pred_region
        _
      $region28: #{anchor_free_forward.3} parent=11 // pred_fallthru
        _
      // Predicated region
      $region29: #{anchor_free_forward.3} parent=11 // pred_check
        %p196 = pneg %p143
      $region30: #{anchor_free_forward.3} parent=11 // pred_check_branch
        %198 = sbr.rel (%p196) target = $region32
      $region31: #{anchor_free_forward.3} parent=11 // pred_region
        _
      $region32: #{anchor_free_forward.3} parent=11 // pred_fallthru
        _
    $region12: #{anchor_free_forward.3} parent=5 // pred_fallthru
      _
    %p199 = scmp.lt.s32.totalorder %s12, 2
    // Predicated region
    $region33: #{anchor_free_forward.3} parent=5 // pred_check
      %p200 = pneg %p199
    $region34: #{anchor_free_forward.3} parent=5 // pred_check_branch
      %202 = sbr.rel (%p200) target = $region36
    $region35: #{anchor_free_forward.3} parent=5 // pred_region
      // Predicated region
      $region37: #{anchor_free_forward.3} parent=35 // pred_check
        %p203 = pneg %p32
      $region38: #{anchor_free_forward.3} parent=35 // pred_check_branch
        %205 = sbr.rel (%p203) target = $region40
      $region39: #{anchor_free_forward.3} parent=35 // pred_region
        %p206 = scmp.lt.s32.totalorder %s12, 1
        %s207 = scalar_select %p206, %s12, 1
        %s208 = smul.addr %s207, 32
        %s209 = smul.addr %s208, 8
        %s210 = scalar_lea.vmem %s0, %s209
      $region40: #{anchor_free_forward.3} parent=35 // pred_fallthru
        _
    $region36: #{anchor_free_forward.3} parent=5 // pred_fallthru
      _
    %p211 = scmp.le.s32.totalorder 1, %s12
    %p212 = scmp.lt.s32.totalorder %s12, 3
    %p213 = pnand %p211, %p212
    %p214 = pneg %p213
    // Predicated region
    $region41: #{anchor_free_forward.3} parent=5 // pred_check
      _
    $region42: #{anchor_free_forward.3} parent=5 // pred_check_branch
      %216 = sbr.rel (%p213) target = $region44
    $region43: #{anchor_free_forward.3} parent=5 // pred_region
      %s217 = ssub.s32 %s12, 1
      %p218 = scmp.lt.s32.totalorder %s17, 1
      %s219 = scalar_select %p218, %s17, 1
      %s220 = smul.addr %s219, 32
      %s221 = smul.addr %s220, 8
      %s222 = scalar_lea.vmem %s0, %s221
      %p223 = pneg %p38
      %p224 = pneg %p35
      %p225 = pneg %p59
      %p226 = pneg %p56
      %p227 = pneg %p80
      %p228 = pneg %p77
      %p229 = pneg %p101
      %p230 = pneg %p98
      %p231 = pneg %p122
      %p232 = pneg %p119
      %p233 = pneg %p143
      %p234 = pneg %p140
      %p235 = pneg %p169
      %p236 = pneg %p166
      %p237 = scmp.lt.s32.totalorder %s17, 1
      %s238 = scalar_select %p237, %s17, 1
      %s239 = smul.addr %s238, 4
      %s240 = smul.addr %s239, 8
      %s241 = scalar_lea.vmem %s6, %s240
      %p242 = scmp.lt.s32.totalorder %s17, 1
      %s243 = scalar_select %p242, %s17, 1
      %s244 = smul.addr %s243, 32
      %s245 = smul.addr %s244, 8
      %s246 = scalar_lea.vmem %s0, %s245
      %p247 = scmp.lt.s32.totalorder %s17, 1
      %s248 = scalar_select %p247, %s17, 1
      %s249 = smul.addr %s248, 4
      %s250 = smul.addr %s249, 8
      %s251 = scalar_lea.vmem %s6, %s250
      %v252 = vld [vmem:[%s246] sm:$0xff]
      %v253 = vld [vmem:[%s246 + $0x8] sm:$0xff]
      %v254 = vld [vmem:[%s246 + $0x10] sm:$0xff]
      %v255 = vld [vmem:[%s246 + $0x18] sm:$0xff]
      %v256 = vld [vmem:[%s246 + $0x20] sm:$0xff]
      %v257 = vld [vmem:[%s246 + $0x28] sm:$0xff]
      %v258 = vld [vmem:[%s246 + $0x30] sm:$0xff]
      %v259 = vld [vmem:[%s246 + $0x38] sm:$0xff]
      %v260 = vld [vmem:[%s246 + $0x40] sm:$0xff]
      %v261 = vld [vmem:[%s246 + $0x48] sm:$0xff]
      %v262 = vld [vmem:[%s246 + $0x50] sm:$0xff]
      %v263 = vld [vmem:[%s246 + $0x58] sm:$0xff]
      %v264 = vld [vmem:[%s246 + $0x60] sm:$0xff]
      %v265 = vld [vmem:[%s246 + $0x68] sm:$0xff]
      %v266 = vld [vmem:[%s246 + $0x70] sm:$0xff]
      %v267 = vld [vmem:[%s246 + $0x78] sm:$0xff]
      %v268 = vld [vmem:[%s246 + $0x80] sm:$0xff]
      %v269 = vld [vmem:[%s246 + $0x88] sm:$0xff]
      %v270 = vld [vmem:[%s246 + $0x90] sm:$0xff]
      %v271 = vld [vmem:[%s246 + $0x98] sm:$0xff]
      %v272 = vld [vmem:[%s246 + $0xa0] sm:$0xff]
      %v273 = vld [vmem:[%s246 + $0xa8] sm:$0xff]
      %v274 = vld [vmem:[%s246 + $0xb0] sm:$0xff]
      %v275 = vld [vmem:[%s246 + $0xb8] sm:$0xff]
      %v276 = vld [vmem:[%s246 + $0xc0] sm:$0xff]
      %v277 = vld [vmem:[%s246 + $0xc8] sm:$0xff]
      %v278 = vld [vmem:[%s246 + $0xd0] sm:$0xff]
      %v279 = vld [vmem:[%s246 + $0xd8] sm:$0xff]
      %v280 = vld [vmem:[%s246 + $0xe0] sm:$0xff]
      %v281 = vld [vmem:[%s246 + $0xe8] sm:$0xff]
      %v282 = vld [vmem:[%s246 + $0xf0] sm:$0xff]
      %v283 = vld [vmem:[%s246 + $0xf8] sm:$0xff]
      %v284 = vld [vmem:[%s1] sm:$0x1]
      %v285 = vmul.f32 %v284, 0.001953125
      %v286 = vld [vmem:[%s1 + $0x1] sm:$0x1]
      %v287 = vmul.f32 %v286, 0.001953125
      %v288 = vmul.f32 %v285, %v285
      %v289 = vsub.f32 %v287, %v288
      %v290 = vld [vmem:[%s2] sm:$0x1]
      %v291 = vadd.f32 %v289, 1e-05
      %v292 = vrsqrt.pop %v291
      %v293 = vmul.f32 %v292, %v291
      %v294 = vmul.f32 %v293, %v292
      %v295 = vmul.f32 0.5, %v294
      %v296 = vsub.f32 1.5, %v295
      %v297 = vmul.f32 %v292, %v296
      %vm298 = vweird.f32 %v291
      %vm299 = vweird.f32 %v292
      %vm300 = vmor %vm298, %vm299
      %v301 = vsel %vm300, %v292, %v297
      %v302 = vmul.f32 %v290, %v301
      %v303 = vld [vmem:[%s3] sm:$0x1]
      %v304 = vmul.f32 %v285, %v302
      %v305 = vsub.f32 %v303, %v304
      %v307 = vperm.slane %v302, 0
      %v309 = vmul.f32 %v252, %v307
      %v310 = vmul.f32 %v253, %v307
      %v311 = vmul.f32 %v254, %v307
      %v312 = vmul.f32 %v255, %v307
      %v313 = vmul.f32 %v256, %v307
      %v314 = vmul.f32 %v257, %v307
      %v315 = vmul.f32 %v258, %v307
      %v316 = vmul.f32 %v259, %v307
      %v317 = vmul.f32 %v260, %v307
      %v318 = vmul.f32 %v261, %v307
      %v319 = vmul.f32 %v262, %v307
      %v320 = vmul.f32 %v263, %v307
      %v321 = vmul.f32 %v264, %v307
      %v322 = vmul.f32 %v265, %v307
      %v323 = vmul.f32 %v266, %v307
      %v324 = vmul.f32 %v267, %v307
      %v325 = vmul.f32 %v268, %v307
      %v326 = vmul.f32 %v269, %v307
      %v327 = vmul.f32 %v270, %v307
      %v328 = vmul.f32 %v271, %v307
      %v329 = vmul.f32 %v272, %v307
      %v330 = vmul.f32 %v273, %v307
      %v331 = vmul.f32 %v274, %v307
      %v332 = vmul.f32 %v275, %v307
      %v333 = vmul.f32 %v276, %v307
      %v334 = vmul.f32 %v277, %v307
      %v335 = vmul.f32 %v278, %v307
      %v336 = vmul.f32 %v279, %v307
      %v337 = vmul.f32 %v280, %v307
      %v338 = vmul.f32 %v281, %v307
      %v339 = vmul.f32 %v282, %v307
      %v340 = vmul.f32 %v283, %v307
      %v342 = vperm.slane %v305, 0
      %v344 = vadd.f32 %v309, %v342
      %v345 = vadd.f32 %v310, %v342
      %v346 = vadd.f32 %v311, %v342
      %v347 = vadd.f32 %v312, %v342
      %v348 = vadd.f32 %v313, %v342
      %v349 = vadd.f32 %v314, %v342
      %v350 = vadd.f32 %v315, %v342
      %v351 = vadd.f32 %v316, %v342
      %v352 = vadd.f32 %v317, %v342
      %v353 = vadd.f32 %v318, %v342
      %v354 = vadd.f32 %v319, %v342
      %v355 = vadd.f32 %v320, %v342
      %v356 = vadd.f32 %v321, %v342
      %v357 = vadd.f32 %v322, %v342
      %v358 = vadd.f32 %v323, %v342
      %v359 = vadd.f32 %v324, %v342
      %v360 = vadd.f32 %v325, %v342
      %v361 = vadd.f32 %v326, %v342
      %v362 = vadd.f32 %v327, %v342
      %v363 = vadd.f32 %v328, %v342
      %v364 = vadd.f32 %v329, %v342
      %v365 = vadd.f32 %v330, %v342
      %v366 = vadd.f32 %v331, %v342
      %v367 = vadd.f32 %v332, %v342
      %v368 = vadd.f32 %v333, %v342
      %v369 = vadd.f32 %v334, %v342
      %v370 = vadd.f32 %v335, %v342
      %v371 = vadd.f32 %v336, %v342
      %v372 = vadd.f32 %v337, %v342
      %v373 = vadd.f32 %v338, %v342
      %v374 = vadd.f32 %v339, %v342
      %v375 = vadd.f32 %v340, %v342
      %v376 = vmax.f32 %v344, 0.0
      %v377 = vmax.f32 %v345, 0.0
      %v378 = vmax.f32 %v346, 0.0
      %v379 = vmax.f32 %v347, 0.0
      %v380 = vmax.f32 %v348, 0.0
      %v381 = vmax.f32 %v349, 0.0
      %v382 = vmax.f32 %v350, 0.0
      %v383 = vmax.f32 %v351, 0.0
      %v384 = vmax.f32 %v352, 0.0
      %v385 = vmax.f32 %v353, 0.0
      %v386 = vmax.f32 %v354, 0.0
      %v387 = vmax.f32 %v355, 0.0
      %v388 = vmax.f32 %v356, 0.0
      %v389 = vmax.f32 %v357, 0.0
      %v390 = vmax.f32 %v358, 0.0
      %v391 = vmax.f32 %v359, 0.0
      %v392 = vmax.f32 %v360, 0.0
      %v393 = vmax.f32 %v361, 0.0
      %v394 = vmax.f32 %v362, 0.0
      %v395 = vmax.f32 %v363, 0.0
      %v396 = vmax.f32 %v364, 0.0
      %v397 = vmax.f32 %v365, 0.0
      %v398 = vmax.f32 %v366, 0.0
      %v399 = vmax.f32 %v367, 0.0
      %v400 = vmax.f32 %v368, 0.0
      %v401 = vmax.f32 %v369, 0.0
      %v402 = vmax.f32 %v370, 0.0
      %v403 = vmax.f32 %v371, 0.0
      %v404 = vmax.f32 %v372, 0.0
      %v405 = vmax.f32 %v373, 0.0
      %v406 = vmax.f32 %v374, 0.0
      %v407 = vmax.f32 %v375, 0.0
      %v408 = vld [vmem:[%s4] sm:$0xff]
      %v409 = vld [vmem:[%s4 + $0x8] sm:$0xff]
      %v410 = vld [vmem:[%s5] sm:$0xff]
      %v411 = vld [vmem:[%s5 + $0x8] sm:$0xff]
      %413 = vset.pattern.permute.xlu0 0
      %414 = vperm.xlu0 %413, %v410
      %v415 = vpop.permute.xlu0 %414
      %418 = vset.pattern.permute.xlu0 0
      %419 = vperm.xlu0 %418, %v411
      %v420 = vpop.permute.xlu0 %419
      %422 = vmatpush.xpose.msra.mxu0 %v391
      %423 = vmatpush.xpose.msra.mxu0 %v390
      %424 = vmatpush.xpose.msra.mxu0 %v389
      %425 = vmatpush.xpose.msra.mxu0 %v388
      %426 = vmatpush.xpose.msra.mxu0 %v387
      %427 = vmatpush.xpose.msra.mxu0 %v386
      %428 = vmatpush.xpose.msra.mxu0 %v385
      %429 = vmatpush.xpose.msra.mxu0 %v384
      %430 = vmatpush.xpose.msra.mxu0 %v383
      %431 = vmatpush.xpose.msra.mxu0 %v382
      %432 = vmatpush.xpose.msra.mxu0 %v381
      %433 = vmatpush.xpose.msra.mxu0 %v380
      %434 = vmatpush.xpose.msra.mxu0 %v379
      %435 = vmatpush.xpose.msra.mxu0 %v378
      %436 = vmatpush.xpose.msra.mxu0 %v377
      %437 = vmatpush.xpose.msra.mxu0 %v376
      %438 = vmatmul.f32.gmra.mxu0 %v408
      %v439 = vpop.f32.mrf.mxu0
      %v440 = vadd.f32 %v415, %v439
      %441 = vmatmul.f32.gmra.mxu0 %v409
      %v442 = vpop.f32.mrf.mxu0
      %v443 = vadd.f32 %v420, %v442
      %444 = vdwg.mxu0
      %445 = vmatpush.xpose.msra.mxu0 %v407
      %446 = vmatpush.xpose.msra.mxu0 %v406
      %447 = vmatpush.xpose.msra.mxu0 %v405
      %448 = vmatpush.xpose.msra.mxu0 %v404
      %449 = vmatpush.xpose.msra.mxu0 %v403
      %450 = vmatpush.xpose.msra.mxu0 %v402
      %451 = vmatpush.xpose.msra.mxu0 %v401
      %452 = vmatpush.xpose.msra.mxu0 %v400
      %453 = vmatpush.xpose.msra.mxu0 %v399
      %454 = vmatpush.xpose.msra.mxu0 %v398
      %455 = vmatpush.xpose.msra.mxu0 %v397
      %456 = vmatpush.xpose.msra.mxu0 %v396
      %457 = vmatpush.xpose.msra.mxu0 %v395
      %458 = vmatpush.xpose.msra.mxu0 %v394
      %459 = vmatpush.xpose.msra.mxu0 %v393
      %460 = vmatpush.xpose.msra.mxu0 %v392
      %461 = vmatmul.f32.gmra.mxu0 %v408
      %v462 = vpop.f32.mrf.mxu0
      %v463 = vadd.f32 %v415, %v462
      %464 = vmatmul.f32.gmra.mxu0 %v409
      %v465 = vpop.f32.mrf.mxu0
      %v466 = vadd.f32 %v420, %v465
      %467 = vdwg.mxu0
      %468 = vst [vmem:[%s251] sm:$0xff] %v440
      %469 = vst [vmem:[%s251 + $0x8] sm:$0xff] %v463
      %470 = vst [vmem:[%s251 + $0x10] sm:$0xff] %v443
      %471 = vst [vmem:[%s251 + $0x18] sm:$0xff] %v466
      %p472 = scmp.lt.s32.totalorder %s17, 1
      %s473 = scalar_select %p472, %s17, 1
      %s474 = smul.addr %s473, 4
      %s475 = smul.addr %s474, 8
      %s476 = scalar_lea.vmem %s6, %s475
      // Predicated region
      $region45: #{anchor_free_forward.3} parent=43 // pred_check
        %p477 = pneg %p166
      $region46: #{anchor_free_forward.3} parent=43 // pred_check_branch
        %479 = sbr.rel (%p477) target = $region48
      $region47: #{anchor_free_forward.3} parent=43 // pred_region
        _
      $region48: #{anchor_free_forward.3} parent=43 // pred_fallthru
        _
    $region44: #{anchor_free_forward.3} parent=5 // pred_fallthru
      _
    %p480 = scmp.le.s32.totalorder 2, %s12
    // Predicated region
    $region49: #{anchor_free_forward.3} parent=5 // pred_check
      %p481 = pneg %p480
    $region50: #{anchor_free_forward.3} parent=5 // pred_check_branch
      %483 = sbr.rel (%p481) target = $region52
    $region51: #{anchor_free_forward.3} parent=5 // pred_region
      %s484 = ssub.s32 %s12, 2
      // Predicated region
      $region53: #{anchor_free_forward.3} parent=51 // pred_check
        %p485 = pneg %p172
      $region54: #{anchor_free_forward.3} parent=51 // pred_check_branch
        %487 = sbr.rel (%p485) target = $region56
      $region55: #{anchor_free_forward.3} parent=51 // pred_region
        %p488 = scmp.lt.s32.totalorder %s18, 1
        %s489 = scalar_select %p488, %s18, 1
        %s490 = smul.addr %s489, 4
        %s491 = smul.addr %s490, 8
        %s492 = scalar_lea.vmem %s6, %s491
      $region56: #{anchor_free_forward.3} parent=51 // pred_fallthru
        _
    $region52: #{anchor_free_forward.3} parent=5 // pred_fallthru
      _
  $region6: #{anchor_free_forward.3} parent=0 // loop_footer
    %s16 = sadd.s32 1, %s12
  $region7: #{anchor_free_forward.3} parent=0 // loop_footer_branch
    %11 = sbr.rel target = $region3
  $region8: #{anchor_free_forward.3} parent=0 // loop_exit
    _

// kernel: anchor_free_forward.2
$region0: #{anchor_free_forward.2}
  #allocation0 [shape = 'u32[]', space=smem, size = 0x4, offset = 0x4, fixed_abs, tag = 'smem constant byte address 0x4 - core index']
  #allocation1 [shape = 'u32[72,128]{1,0:T(1,128)}', space=vmem, size = 0x9000, scoped, tag = 'internal scratch']
  #allocation2 [shape = 'f32[18,18,128]{2,1,0:T(8,128)}', space=vmem, size = 0x36000, scoped, tag = 'scratch operand']
  %s0 = inlined_call_operand.hbm [shape: f32[2,16,16,128], index: 0, kind: input, shape index: {}]
  %s1 = inlined_call_operand.hbm [shape: f32[1152,128], index: 1, kind: input, shape index: {}]
  %s2 = inlined_call_operand.vmem [shape: f32[1,128], index: 2, kind: input, shape index: {}]
  %s3 = inlined_call_operand.vmem [shape: f32[2,256,128], index: 3, kind: output, shape index: {0}]
  %s4 = inlined_call_operand.vmem [shape: f32[2,128], index: 4, kind: output, shape index: {1}]
  %5 = xla_tuple %s3, %s4
  %s6 = sld [smem:[#allocation0]]
  $region65: #{anchor_free_forward.2} parent=0
    _
  %s8 = ssub.s32 1, %s6
  %s9 = scalar_select 0, %s8, %s6
  $region1: #{anchor_free_forward.2} parent=0
    #allocation3 [shape = 'u8[262144]{0}', space=vmem, size = 0x40000, scoped, tag = 'input window, operand 0']
    #allocation4 [shape = 's32[2]{0}', space=sflag, size = 0x8, scoped, tag = 'scoped memory for anchor_free_forward.2']
    #allocation5 [shape = 'u8[589824]{0}', space=vmem, size = 0x90000, scoped, tag = 'input window, operand 1, single buffered']
    #allocation6 [shape = 's32[1]{0}', space=sflag, size = 0x4, scoped, tag = 'scoped memory for anchor_free_forward.2']
    %10 = vsyncpa [#allocation4], 0
    %s11 = scalar_lea.sflag [#allocation4], 1
    %12 = vsyncpa %s11, 0
    %13 = vsyncpa [#allocation6], 0
    loop: start=0, step=1, limit=4
    $region2: #{anchor_free_forward.2} parent=1 // loop_pre_header
      _
    $region3: #{anchor_free_forward.2} parent=1 // loop_header
      %s15 = sphi 0, %s19
      %p16 = scmp.ge.s32.totalorder %s15, 4
      %s25 = sphi 0, %s27
      %s28 = sphi 0, %s25
      %s29 = sphi 0, %s28
      %s45 = sphi 0, %s29
      %s49 = sphi 0, %s49
      %s51 = sphi 0, %s49
      %s52 = sphi 0, %s51
      %s66 = sphi 0, %s52
      %s70 = sphi 0, %s70
      %s72 = sphi 0, %s70
      %s73 = sphi 0, %s72
      %s87 = sphi 0, %s73
      %s93 = sphi 0, %s95
      %s96 = sphi 0, %s93
      %s97 = sphi 0, %s96
      %s113 = sphi 0, %s97
      %s117 = sphi 0, %s117
      %s119 = sphi 0, %s117
      %s120 = sphi 0, %s119
      %s134 = sphi 0, %s120
    $region4: #{anchor_free_forward.2} parent=1 // loop_header_branch
      %18 = sbr.rel (%p16) target = $region8
    $region5: #{anchor_free_forward.2} parent=1 // loop_body
      %s20 = ssub.s32 %s15, 1
      %s21 = ssub.s32 %s15, 2
      %s22 = sadd.s32 %s15, 1
      %s23 = ssub.s32 %s15, %s22
      %p24 = scmp.eq.s32.totalorder %s23, 0
      %s26 = sadd.s32 %s25, 1
      %s27 = scalar_select %p24, %s25, %s26
      %p30 = pneg %p24
      %p31 = scmp.eq.s32.totalorder %s15, 1
      %p32 = por %p30, %p31
      %p33 = scmp.ne.s32.totalorder %s25, %s28
      %p34 = scmp.eq.s32.totalorder %s15, 0
      %p35 = por %p33, %p34
      %p36 = scmp.ne.s32.totalorder %s25, %s28
      %p37 = scmp.eq.s32.totalorder %s20, 1
      %p38 = por %p36, %p37
      %p39 = scmp.ne.s32.totalorder %s28, %s29
      %p40 = scmp.eq.s32.totalorder %s20, 0
      %p41 = por %p39, %p40
      %p42 = scmp.ne.s32.totalorder %s28, %s29
      %p43 = scmp.eq.s32.totalorder %s21, 1
      %p44 = por %p42, %p43
      %p46 = scmp.ne.s32.totalorder %s29, %s45
      %p47 = scmp.eq.s32.totalorder %s21, 0
      %p48 = por %p46, %p47
      %s50 = sadd.s32 %s49, 1
      %p53 = scmp.eq.s32.totalorder %s15, 1
      %p54 = scmp.ne.s32.totalorder %s49, %s51
      %p55 = scmp.eq.s32.totalorder %s15, 0
      %p56 = por %p54, %p55
      %p57 = scmp.ne.s32.totalorder %s49, %s51
      %p58 = scmp.eq.s32.totalorder %s20, 1
      %p59 = por %p57, %p58
      %p60 = scmp.ne.s32.totalorder %s51, %s52
      %p61 = scmp.eq.s32.totalorder %s20, 0
      %p62 = por %p60, %p61
      %p63 = scmp.ne.s32.totalorder %s51, %s52
      %p64 = scmp.eq.s32.totalorder %s21, 1
      %p65 = por %p63, %p64
      %p67 = scmp.ne.s32.totalorder %s52, %s66
      %p68 = scmp.eq.s32.totalorder %s21, 0
      %p69 = por %p67, %p68
      %s71 = sadd.s32 %s70, 1
      %p74 = scmp.eq.s32.totalorder %s15, 1
      %p75 = scmp.ne.s32.totalorder %s70, %s72
      %p76 = scmp.eq.s32.totalorder %s15, 0
      %p77 = por %p75, %p76
      %p78 = scmp.ne.s32.totalorder %s70, %s72
      %p79 = scmp.eq.s32.totalorder %s20, 1
      %p80 = por %p78, %p79
      %p81 = scmp.ne.s32.totalorder %s72, %s73
      %p82 = scmp.eq.s32.totalorder %s20, 0
      %p83 = por %p81, %p82
      %p84 = scmp.ne.s32.totalorder %s72, %s73
      %p85 = scmp.eq.s32.totalorder %s21, 1
      %p86 = por %p84, %p85
      %p88 = scmp.ne.s32.totalorder %s73, %s87
      %p89 = scmp.eq.s32.totalorder %s21, 0
      %p90 = por %p88, %p89
      %s91 = ssub.s32 %s15, %s22
      %p92 = scmp.eq.s32.totalorder %s91, 0
      %s94 = sadd.s32 %s93, 1
      %s95 = scalar_select %p92, %s93, %s94
      %p98 = pneg %p92
      %p99 = scmp.eq.s32.totalorder %s15, 1
      %p100 = por %p98, %p99
      %p101 = scmp.ne.s32.totalorder %s93, %s96
      %p102 = scmp.eq.s32.totalorder %s15, 0
      %p103 = por %p101, %p102
      %p104 = scmp.ne.s32.totalorder %s93, %s96
      %p105 = scmp.eq.s32.totalorder %s20, 1
      %p106 = por %p104, %p105
      %p107 = scmp.ne.s32.totalorder %s96, %s97
      %p108 = scmp.eq.s32.totalorder %s20, 0
      %p109 = por %p107, %p108
      %p110 = scmp.ne.s32.totalorder %s96, %s97
      %p111 = scmp.eq.s32.totalorder %s21, 1
      %p112 = por %p110, %p111
      %p114 = scmp.ne.s32.totalorder %s97, %s113
      %p115 = scmp.eq.s32.totalorder %s21, 0
      %p116 = por %p114, %p115
      %s118 = sadd.s32 %s117, 1
      %p121 = scmp.eq.s32.totalorder %s15, 1
      %p122 = scmp.ne.s32.totalorder %s117, %s119
      %p123 = scmp.eq.s32.totalorder %s15, 0
      %p124 = por %p122, %p123
      %p125 = scmp.ne.s32.totalorder %s117, %s119
      %p126 = scmp.eq.s32.totalorder %s20, 1
      %p127 = por %p125, %p126
      %p128 = scmp.ne.s32.totalorder %s119, %s120
      %p129 = scmp.eq.s32.totalorder %s20, 0
      %p130 = por %p128, %p129
      %p131 = scmp.ne.s32.totalorder %s119, %s120
      %p132 = scmp.eq.s32.totalorder %s21, 1
      %p133 = por %p131, %p132
      %p135 = scmp.ne.s32.totalorder %s120, %s134
      %p136 = scmp.eq.s32.totalorder %s21, 0
      %p137 = por %p135, %p136
      %p138 = scmp.le.s32.totalorder 1, %s15
      %p139 = scmp.lt.s32.totalorder %s15, 3
      %p140 = pnand %p138, %p139
      %p141 = pneg %p140
      // Predicated region
      $region9: #{anchor_free_forward.2} parent=5 // pred_check
        _
      $region10: #{anchor_free_forward.2} parent=5 // pred_check_branch
        %143 = sbr.rel (%p140) target = $region12
      $region11: #{anchor_free_forward.2} parent=5 // pred_region
        %s144 = ssub.s32 %s15, 1
        // Predicated region
        $region13: #{anchor_free_forward.2} parent=11 // pred_check
          %p145 = pneg %p62
        $region14: #{anchor_free_forward.2} parent=11 // pred_check_branch
          %147 = sbr.rel (%p145) target = $region16
        $region15: #{anchor_free_forward.2} parent=11 // pred_region
          %149 = vsyncadd [#allocation6], 0
          %s150 = sshll.u32 %s1, 4
          %s151 = int_to_ptr.hbm [resolvable:$true] %s150
          %s152 = sshll.u32 [#allocation5], 4
          %s153 = int_to_ptr.vmem [resolvable:$true] %s152
          %158 = dma.hbm_to_vmem [thread:$0]  %s151, 18432, %s153, [#allocation6], 128, 128, 8
        $region16: #{anchor_free_forward.2} parent=11 // pred_fallthru
          _
        // Predicated region
        $region17: #{anchor_free_forward.2} parent=11 // pred_check
          %p159 = pneg %p83
        $region18: #{anchor_free_forward.2} parent=11 // pred_check_branch
          %161 = sbr.rel (%p159) target = $region20
        $region19: #{anchor_free_forward.2} parent=11 // pred_region
          _
        $region20: #{anchor_free_forward.2} parent=11 // pred_fallthru
          _
      $region12: #{anchor_free_forward.2} parent=5 // pred_fallthru
        _
      %p162 = scmp.lt.s32.totalorder %s15, 2
      // Predicated region
      $region21: #{anchor_free_forward.2} parent=5 // pred_check
        %p163 = pneg %p162
      $region22: #{anchor_free_forward.2} parent=5 // pred_check_branch
        %165 = sbr.rel (%p163) target = $region24
      $region23: #{anchor_free_forward.2} parent=5 // pred_region
        // Predicated region
        $region25: #{anchor_free_forward.2} parent=23 // pred_check
          %p166 = pneg %p35
        $region26: #{anchor_free_forward.2} parent=23 // pred_check_branch
          %168 = sbr.rel (%p166) target = $region28
        $region27: #{anchor_free_forward.2} parent=23 // pred_region
          %s169 = sand.u32 %s25, 1
          %s170 = scalar_lea.sflag [#allocation4], %s169
          %s171 = sand.u32 %s25, 1
          %s172 = smul.addr %s171, 256
          %s173 = scalar_lea.vmem [#allocation3], %s172
          %175 = vsyncadd %s170, 0
          %s176 = smul.addr %s15, 32
          %s177 = smul.addr %s176, 8
          %s178 = scalar_lea.hbm %s0, %s177
          %s179 = sshll.u32 %s178, 4
          %s180 = int_to_ptr.hbm [resolvable:$true] %s179
          %s181 = sshll.u32 %s173, 4
          %s182 = int_to_ptr.vmem [resolvable:$true] %s181
          %187 = dma.hbm_to_vmem [thread:$0]  %s180, 4096, %s182, %s170, 128, 128, 8
        $region28: #{anchor_free_forward.2} parent=23 // pred_fallthru
          _
      $region24: #{anchor_free_forward.2} parent=5 // pred_fallthru
        _
      %p188 = scmp.le.s32.totalorder 1, %s15
      %p189 = scmp.lt.s32.totalorder %s15, 3
      %p190 = pnand %p188, %p189
      %p191 = pneg %p190
      // Predicated region
      $region29: #{anchor_free_forward.2} parent=5 // pred_check
        _
      $region30: #{anchor_free_forward.2} parent=5 // pred_check_branch
        %193 = sbr.rel (%p190) target = $region32
      $region31: #{anchor_free_forward.2} parent=5 // pred_region
        %s194 = ssub.s32 %s15, 1
        %s195 = sand.u32 %s28, 1
        %s196 = scalar_lea.sflag [#allocation4], %s195
        %s197 = sand.u32 %s28, 1
        %s198 = smul.addr %s197, 256
        %s199 = scalar_lea.vmem [#allocation3], %s198
        // Predicated region
        $region33: #{anchor_free_forward.2} parent=31 // pred_check
          %p200 = pneg %p41
        $region34: #{anchor_free_forward.2} parent=31 // pred_check_branch
          %202 = sbr.rel (%p200) target = $region36
        $region35: #{anchor_free_forward.2} parent=31 // pred_region
          %204 = dma.done %s196, 4096
        $region36: #{anchor_free_forward.2} parent=31 // pred_fallthru
          _
        // Predicated region
        $region37: #{anchor_free_forward.2} parent=31 // pred_check
          %p205 = pneg %p62
        $region38: #{anchor_free_forward.2} parent=31 // pred_check_branch
          %207 = sbr.rel (%p205) target = $region40
        $region39: #{anchor_free_forward.2} parent=31 // pred_region
          %209 = dma.done [#allocation6], 18432
        $region40: #{anchor_free_forward.2} parent=31 // pred_fallthru
          _
        %s210 = sand.u32 %s28, 1
        %s211 = scalar_lea.sflag [#allocation4], %s210
        %s212 = sand.u32 %s28, 1
        %s213 = smul.addr %s212, 256
        %s214 = scalar_lea.vmem [#allocation3], %s213
        %p215 = pneg %p41
        %p216 = pneg %p38
        %p217 = pneg %p62
        %p218 = pneg %p59
        %p219 = pneg %p83
        %p220 = pneg %p80
        %p221 = pneg %p109
        %p222 = pneg %p106
        %p223 = scmp.lt.s32.totalorder %s20, 1
        %s224 = scalar_select %p223, %s20, 1
        %s225 = smul.addr %s224, 32
        %s226 = smul.addr %s225, 8
        %s227 = scalar_lea.vmem %s3, %s226
        %p228 = pneg %p130
        %p229 = pneg %p127
        %p230 = scmp.lt.s32.totalorder %s20, 1
        %s231 = scalar_select %p230, %s20, 1
        %s232 = smul.addr %s231, 32
        %s233 = smul.addr %s232, 8
        %s234 = scalar_lea.vmem %s3, %s233
        %p235 = scmp.eq.s32.totalorder %s20, 0
        // Predicated region
        $region41: #{anchor_free_forward.2} parent=31 // pred_check
          %p236 = pneg %p235
        $region42: #{anchor_free_forward.2} parent=31 // pred_check_branch
          %238 = sbr.rel (%p236) target = $region44
        $region43: #{anchor_free_forward.2} parent=31 // pred_region
          %239 = vst [vmem:[#allocation2] sm:$0xff] 0.0
          %240 = vst [vmem:[#allocation2 + $0x8] sm:$0xff] 0.0
          %241 = vst [vmem:[#allocation2 + $0x10] sm:$0x3] 0.0
          %242 = vst [vmem:[#allocation2 + $0x18] sm:$0xff] 0.0
          %243 = vst [vmem:[#allocation2 + $0x20] sm:$0xff] 0.0
          %244 = vst [vmem:[#allocation2 + $0x28] sm:$0x3] 0.0
          %245 = vst [vmem:[#allocation2 + $0x30] sm:$0xff] 0.0
          %246 = vst [vmem:[#allocation2 + $0x38] sm:$0xff] 0.0
          %247 = vst [vmem:[#allocation2 + $0x40] sm:$0x3] 0.0
          %248 = vst [vmem:[#allocation2 + $0x48] sm:$0xff] 0.0
          %249 = vst [vmem:[#allocation2 + $0x50] sm:$0xff] 0.0
          %250 = vst [vmem:[#allocation2 + $0x58] sm:$0x3] 0.0
          %251 = vst [vmem:[#allocation2 + $0x60] sm:$0xff] 0.0
          %252 = vst [vmem:[#allocation2 + $0x68] sm:$0xff] 0.0
          %253 = vst [vmem:[#allocation2 + $0x70] sm:$0x3] 0.0
          %254 = vst [vmem:[#allocation2 + $0x78] sm:$0xff] 0.0
          %255 = vst [vmem:[#allocation2 + $0x80] sm:$0xff] 0.0
          %256 = vst [vmem:[#allocation2 + $0x88] sm:$0x3] 0.0
          %257 = vst [vmem:[#allocation2 + $0x90] sm:$0xff] 0.0
          %258 = vst [vmem:[#allocation2 + $0x98] sm:$0xff] 0.0
          %259 = vst [vmem:[#allocation2 + $0xa0] sm:$0x3] 0.0
          %260 = vst [vmem:[#allocation2 + $0xa8] sm:$0xff] 0.0
          %261 = vst [vmem:[#allocation2 + $0xb0] sm:$0xff] 0.0
          %262 = vst [vmem:[#allocation2 + $0xb8] sm:$0x3] 0.0
          %263 = vst [vmem:[#allocation2 + $0xc0] sm:$0xff] 0.0
          %264 = vst [vmem:[#allocation2 + $0xc8] sm:$0xff] 0.0
          %265 = vst [vmem:[#allocation2 + $0xd0] sm:$0x3] 0.0
          %266 = vst [vmem:[#allocation2 + $0xd8] sm:$0xff] 0.0
          %267 = vst [vmem:[#allocation2 + $0xe0] sm:$0xff] 0.0
          %268 = vst [vmem:[#allocation2 + $0xe8] sm:$0x3] 0.0
          %269 = vst [vmem:[#allocation2 + $0xf0] sm:$0xff] 0.0
          %270 = vst [vmem:[#allocation2 + $0xf8] sm:$0xff] 0.0
          %271 = vst [vmem:[#allocation2 + $0x100] sm:$0x3] 0.0
          %272 = vst [vmem:[#allocation2 + $0x108] sm:$0xff] 0.0
          %273 = vst [vmem:[#allocation2 + $0x110] sm:$0xff] 0.0
          %274 = vst [vmem:[#allocation2 + $0x118] sm:$0x3] 0.0
          %275 = vst [vmem:[#allocation2 + $0x120] sm:$0xff] 0.0
          %276 = vst [vmem:[#allocation2 + $0x128] sm:$0xff] 0.0
          %277 = vst [vmem:[#allocation2 + $0x130] sm:$0x3] 0.0
          %278 = vst [vmem:[#allocation2 + $0x138] sm:$0xff] 0.0
          %279 = vst [vmem:[#allocation2 + $0x140] sm:$0xff] 0.0
          %280 = vst [vmem:[#allocation2 + $0x148] sm:$0x3] 0.0
          %281 = vst [vmem:[#allocation2 + $0x150] sm:$0xff] 0.0
          %282 = vst [vmem:[#allocation2 + $0x158] sm:$0xff] 0.0
          %283 = vst [vmem:[#allocation2 + $0x160] sm:$0x3] 0.0
          %284 = vst [vmem:[#allocation2 + $0x168] sm:$0xff] 0.0
          %285 = vst [vmem:[#allocation2 + $0x170] sm:$0xff] 0.0
          %286 = vst [vmem:[#allocation2 + $0x178] sm:$0x3] 0.0
          %287 = vst [vmem:[#allocation2 + $0x180] sm:$0xff] 0.0
          %288 = vst [vmem:[#allocation2 + $0x188] sm:$0xff] 0.0
          %289 = vst [vmem:[#allocation2 + $0x190] sm:$0x3] 0.0
          %290 = vst [vmem:[#allocation2 + $0x198] sm:$0xff] 0.0
          %291 = vst [vmem:[#allocation2 + $0x1a0] sm:$0xff] 0.0
          %292 = vst [vmem:[#allocation2 + $0x1a8] sm:$0x3] 0.0
          %293 = vst [vmem:[%s4] sm:$0x3] 0.0
        $region44: #{anchor_free_forward.2} parent=31 // pred_fallthru
          _
        %v294 = vld [vmem:[%s199] sm:$0xff]
        %v295 = vld [vmem:[%s199 + $0x8] sm:$0xff]
        %v296 = vld [vmem:[%s199 + $0x10] sm:$0xff]
        %v297 = vld [vmem:[%s199 + $0x18] sm:$0xff]
        %v298 = vld [vmem:[%s199 + $0x20] sm:$0xff]
        %v299 = vld [vmem:[%s199 + $0x28] sm:$0xff]
        %v300 = vld [vmem:[%s199 + $0x30] sm:$0xff]
        %v301 = vld [vmem:[%s199 + $0x38] sm:$0xff]
        %v302 = vld [vmem:[%s199 + $0x40] sm:$0xff]
        %v303 = vld [vmem:[%s199 + $0x48] sm:$0xff]
        %v304 = vld [vmem:[%s199 + $0x50] sm:$0xff]
        %v305 = vld [vmem:[%s199 + $0x58] sm:$0xff]
        %v306 = vld [vmem:[%s199 + $0x60] sm:$0xff]
        %v307 = vld [vmem:[%s199 + $0x68] sm:$0xff]
        %v308 = vld [vmem:[%s199 + $0x70] sm:$0xff]
        %v309 = vld [vmem:[%s199 + $0x78] sm:$0xff]
        %v310 = vld [vmem:[%s199 + $0x80] sm:$0xff]
        %v311 = vld [vmem:[%s199 + $0x88] sm:$0xff]
        %v312 = vld [vmem:[%s199 + $0x90] sm:$0xff]
        %v313 = vld [vmem:[%s199 + $0x98] sm:$0xff]
        %v314 = vld [vmem:[%s199 + $0xa0] sm:$0xff]
        %v315 = vld [vmem:[%s199 + $0xa8] sm:$0xff]
        %v316 = vld [vmem:[%s199 + $0xb0] sm:$0xff]
        %v317 = vld [vmem:[%s199 + $0xb8] sm:$0xff]
        %v318 = vld [vmem:[%s199 + $0xc0] sm:$0xff]
        %v319 = vld [vmem:[%s199 + $0xc8] sm:$0xff]
        %v320 = vld [vmem:[%s199 + $0xd0] sm:$0xff]
        %v321 = vld [vmem:[%s199 + $0xd8] sm:$0xff]
        %v322 = vld [vmem:[%s199 + $0xe0] sm:$0xff]
        %v323 = vld [vmem:[%s199 + $0xe8] sm:$0xff]
        %v324 = vld [vmem:[%s199 + $0xf0] sm:$0xff]
        %v325 = vld [vmem:[%s199 + $0xf8] sm:$0xff]
        %s326 = scalar_lea.vmem [#allocation2], 24
        %327 = vst [vmem:[%s326 + $0x1] sm:$0xff] %v294
        %328 = vst [vmem:[%s326 + $0x9] sm:$0xff] %v295
        %329 = vst [vmem:[%s326 + $0x19] sm:$0xff] %v296
        %330 = vst [vmem:[%s326 + $0x21] sm:$0xff] %v297
        %331 = vst [vmem:[%s326 + $0x31] sm:$0xff] %v298
        %332 = vst [vmem:[%s326 + $0x39] sm:$0xff] %v299
        %333 = vst [vmem:[%s326 + $0x49] sm:$0xff] %v300
        %334 = vst [vmem:[%s326 + $0x51] sm:$0xff] %v301
        %335 = vst [vmem:[%s326 + $0x61] sm:$0xff] %v302
        %336 = vst [vmem:[%s326 + $0x69] sm:$0xff] %v303
        %337 = vst [vmem:[%s326 + $0x79] sm:$0xff] %v304
        %338 = vst [vmem:[%s326 + $0x81] sm:$0xff] %v305
        %339 = vst [vmem:[%s326 + $0x91] sm:$0xff] %v306
        %340 = vst [vmem:[%s326 + $0x99] sm:$0xff] %v307
        %341 = vst [vmem:[%s326 + $0xa9] sm:$0xff] %v308
        %342 = vst [vmem:[%s326 + $0xb1] sm:$0xff] %v309
        %343 = vst [vmem:[%s326 + $0xc1] sm:$0xff] %v310
        %344 = vst [vmem:[%s326 + $0xc9] sm:$0xff] %v311
        %345 = vst [vmem:[%s326 + $0xd9] sm:$0xff] %v312
        %346 = vst [vmem:[%s326 + $0xe1] sm:$0xff] %v313
        %347 = vst [vmem:[%s326 + $0xf1] sm:$0xff] %v314
        %348 = vst [vmem:[%s326 + $0xf9] sm:$0xff] %v315
        %349 = vst [vmem:[%s326 + $0x109] sm:$0xff] %v316
        %350 = vst [vmem:[%s326 + $0x111] sm:$0xff] %v317
        %351 = vst [vmem:[%s326 + $0x121] sm:$0xff] %v318
        %352 = vst [vmem:[%s326 + $0x129] sm:$0xff] %v319
        %353 = vst [vmem:[%s326 + $0x139] sm:$0xff] %v320
        %354 = vst [vmem:[%s326 + $0x141] sm:$0xff] %v321
        %355 = vst [vmem:[%s326 + $0x151] sm:$0xff] %v322
        %356 = vst [vmem:[%s326 + $0x159] sm:$0xff] %v323
        %357 = vst [vmem:[%s326 + $0x169] sm:$0xff] %v324
        %358 = vst [vmem:[%s326 + $0x171] sm:$0xff] %v325
        %v359 = vld [vmem:[#allocation2] sm:$0xff]
        %v360 = vld [vmem:[#allocation2 + $0x8] sm:$0xff]
        %v361 = vld [vmem:[#allocation2 + $0x18] sm:$0xff]
        %v362 = vld [vmem:[#allocation2 + $0x20] sm:$0xff]
        %v363 = vld [vmem:[#allocation2 + $0x30] sm:$0xff]
        %v364 = vld [vmem:[#allocation2 + $0x38] sm:$0xff]
        %v365 = vld [vmem:[#allocation2 + $0x48] sm:$0xff]
        %v366 = vld [vmem:[#allocation2 + $0x50] sm:$0xff]
        %v367 = vld [vmem:[#allocation2 + $0x60] sm:$0xff]
        %v368 = vld [vmem:[#allocation2 + $0x68] sm:$0xff]
        %v369 = vld [vmem:[#allocation2 + $0x78] sm:$0xff]
        %v370 = vld [vmem:[#allocation2 + $0x80] sm:$0xff]
        %v371 = vld [vmem:[#allocation2 + $0x90] sm:$0xff]
        %v372 = vld [vmem:[#allocation2 + $0x98] sm:$0xff]
        %v373 = vld [vmem:[#allocation2 + $0xa8] sm:$0xff]
        %v374 = vld [vmem:[#allocation2 + $0xb0] sm:$0xff]
        %v375 = vld [vmem:[#allocation2 + $0xc0] sm:$0xff]
        %v376 = vld [vmem:[#allocation2 + $0xc8] sm:$0xff]
        %v377 = vld [vmem:[#allocation2 + $0xd8] sm:$0xff]
        %v378 = vld [vmem:[#allocation2 + $0xe0] sm:$0xff]
        %v379 = vld [vmem:[#allocation2 + $0xf0] sm:$0xff]
        %v380 = vld [vmem:[#allocation2 + $0xf8] sm:$0xff]
        %v381 = vld [vmem:[#allocation2 + $0x108] sm:$0xff]
        %v382 = vld [vmem:[#allocation2 + $0x110] sm:$0xff]
        %v383 = vld [vmem:[#allocation2 + $0x120] sm:$0xff]
        %v384 = vld [vmem:[#allocation2 + $0x128] sm:$0xff]
        %v385 = vld [vmem:[#allocation2 + $0x138] sm:$0xff]
        %v386 = vld [vmem:[#allocation2 + $0x140] sm:$0xff]
        %v387 = vld [vmem:[#allocation2 + $0x150] sm:$0xff]
        %v388 = vld [vmem:[#allocation2 + $0x158] sm:$0xff]
        %v389 = vld [vmem:[#allocation2 + $0x168] sm:$0xff]
        %v390 = vld [vmem:[#allocation2 + $0x170] sm:$0xff]
        %v391 = vld [vmem:[#allocation2 + $0x1] sm:$0xff]
        %v392 = vld [vmem:[#allocation2 + $0x9] sm:$0xff]
        %v393 = vld [vmem:[#allocation2 + $0x19] sm:$0xff]
        %v394 = vld [vmem:[#allocation2 + $0x21] sm:$0xff]
        %v395 = vld [vmem:[#allocation2 + $0x31] sm:$0xff]
        %v396 = vld [vmem:[#allocation2 + $0x39] sm:$0xff]
        %v397 = vld [vmem:[#allocation2 + $0x49] sm:$0xff]
        %v398 = vld [vmem:[#allocation2 + $0x51] sm:$0xff]
        %v399 = vld [vmem:[#allocation2 + $0x61] sm:$0xff]
        %v400 = vld [vmem:[#allocation2 + $0x69] sm:$0xff]
        %v401 = vld [vmem:[#allocation2 + $0x79] sm:$0xff]
        %v402 = vld [vmem:[#allocation2 + $0x81] sm:$0xff]
        %v403 = vld [vmem:[#allocation2 + $0x91] sm:$0xff]
        %v404 = vld [vmem:[#allocation2 + $0x99] sm:$0xff]
        %v405 = vld [vmem:[#allocation2 + $0xa9] sm:$0xff]
        %v406 = vld [vmem:[#allocation2 + $0xb1] sm:$0xff]
        %v407 = vld [vmem:[#allocation2 + $0xc1] sm:$0xff]
        %v408 = vld [vmem:[#allocation2 + $0xc9] sm:$0xff]
        %v409 = vld [vmem:[#allocation2 + $0xd9] sm:$0xff]
        %v410 = vld [vmem:[#allocation2 + $0xe1] sm:$0xff]
        %v411 = vld [vmem:[#allocation2 + $0xf1] sm:$0xff]
        %v412 = vld [vmem:[#allocation2 + $0xf9] sm:$0xff]
        %v413 = vld [vmem:[#allocation2 + $0x109] sm:$0xff]
        %v414 = vld [vmem:[#allocation2 + $0x111] sm:$0xff]
        %v415 = vld [vmem:[#allocation2 + $0x121] sm:$0xff]
        %v416 = vld [vmem:[#allocation2 + $0x129] sm:$0xff]
        %v417 = vld [vmem:[#allocation2 + $0x139] sm:$0xff]
        %v418 = vld [vmem:[#allocation2 + $0x141] sm:$0xff]
        %v419 = vld [vmem:[#allocation2 + $0x151] sm:$0xff]
        %v420 = vld [vmem:[#allocation2 + $0x159] sm:$0xff]
        %v421 = vld [vmem:[#allocation2 + $0x169] sm:$0xff]
        %v422 = vld [vmem:[#allocation2 + $0x171] sm:$0xff]
        %v423 = vld [vmem:[#allocation2 + $0x2] sm:$0xff]
        %v424 = vld [vmem:[#allocation2 + $0xa] sm:$0xff]
        %v425 = vld [vmem:[#allocation2 + $0x1a] sm:$0xff]
        %v426 = vld [vmem:[#allocation2 + $0x22] sm:$0xff]
        %v427 = vld [vmem:[#allocation2 + $0x32] sm:$0xff]
        %v428 = vld [vmem:[#allocation2 + $0x3a] sm:$0xff]
        %v429 = vld [vmem:[#allocation2 + $0x4a] sm:$0xff]
        %v430 = vld [vmem:[#allocation2 + $0x52] sm:$0xff]
        %v431 = vld [vmem:[#allocation2 + $0x62] sm:$0xff]
        %v432 = vld [vmem:[#allocation2 + $0x6a] sm:$0xff]
        %v433 = vld [vmem:[#allocation2 + $0x7a] sm:$0xff]
        %v434 = vld [vmem:[#allocation2 + $0x82] sm:$0xff]
        %v435 = vld [vmem:[#allocation2 + $0x92] sm:$0xff]
        %v436 = vld [vmem:[#allocation2 + $0x9a] sm:$0xff]
        %v437 = vld [vmem:[#allocation2 + $0xaa] sm:$0xff]
        %v438 = vld [vmem:[#allocation2 + $0xb2] sm:$0xff]
        %v439 = vld [vmem:[#allocation2 + $0xc2] sm:$0xff]
        %v440 = vld [vmem:[#allocation2 + $0xca] sm:$0xff]
        %v441 = vld [vmem:[#allocation2 + $0xda] sm:$0xff]
        %v442 = vld [vmem:[#allocation2 + $0xe2] sm:$0xff]
        %v443 = vld [vmem:[#allocation2 + $0xf2] sm:$0xff]
        %v444 = vld [vmem:[#allocation2 + $0xfa] sm:$0xff]
        %v445 = vld [vmem:[#allocation2 + $0x10a] sm:$0xff]
        %v446 = vld [vmem:[#allocation2 + $0x112] sm:$0xff]
        %v447 = vld [vmem:[#allocation2 + $0x122] sm:$0xff]
        %v448 = vld [vmem:[#allocation2 + $0x12a] sm:$0xff]
        %v449 = vld [vmem:[#allocation2 + $0x13a] sm:$0xff]
        %v450 = vld [vmem:[#allocation2 + $0x142] sm:$0xff]
        %v451 = vld [vmem:[#allocation2 + $0x152] sm:$0xff]
        %v452 = vld [vmem:[#allocation2 + $0x15a] sm:$0xff]
        %v453 = vld [vmem:[#allocation2 + $0x16a] sm:$0xff]
        %v454 = vld [vmem:[#allocation2 + $0x172] sm:$0xff]
        %v455 = vld [vmem:[%s326] sm:$0xff]
        %v456 = vld [vmem:[%s326 + $0x8] sm:$0xff]
        %v457 = vld [vmem:[%s326 + $0x18] sm:$0xff]
        %v458 = vld [vmem:[%s326 + $0x20] sm:$0xff]
        %v459 = vld [vmem:[%s326 + $0x30] sm:$0xff]
        %v460 = vld [vmem:[%s326 + $0x38] sm:$0xff]
        %v461 = vld [vmem:[%s326 + $0x48] sm:$0xff]
        %v462 = vld [vmem:[%s326 + $0x50] sm:$0xff]
        %v463 = vld [vmem:[%s326 + $0x60] sm:$0xff]
        %v464 = vld [vmem:[%s326 + $0x68] sm:$0xff]
        %v465 = vld [vmem:[%s326 + $0x78] sm:$0xff]
        %v466 = vld [vmem:[%s326 + $0x80] sm:$0xff]
        %v467 = vld [vmem:[%s326 + $0x90] sm:$0xff]
        %v468 = vld [vmem:[%s326 + $0x98] sm:$0xff]
        %v469 = vld [vmem:[%s326 + $0xa8] sm:$0xff]
        %v470 = vld [vmem:[%s326 + $0xb0] sm:$0xff]
        %v471 = vld [vmem:[%s326 + $0xc0] sm:$0xff]
        %v472 = vld [vmem:[%s326 + $0xc8] sm:$0xff]
        %v473 = vld [vmem:[%s326 + $0xd8] sm:$0xff]
        %v474 = vld [vmem:[%s326 + $0xe0] sm:$0xff]
        %v475 = vld [vmem:[%s326 + $0xf0] sm:$0xff]
        %v476 = vld [vmem:[%s326 + $0xf8] sm:$0xff]
        %v477 = vld [vmem:[%s326 + $0x108] sm:$0xff]
        %v478 = vld [vmem:[%s326 + $0x110] sm:$0xff]
        %v479 = vld [vmem:[%s326 + $0x120] sm:$0xff]
        %v480 = vld [vmem:[%s326 + $0x128] sm:$0xff]
        %v481 = vld [vmem:[%s326 + $0x138] sm:$0xff]
        %v482 = vld [vmem:[%s326 + $0x140] sm:$0xff]
        %v483 = vld [vmem:[%s326 + $0x150] sm:$0xff]
        %v484 = vld [vmem:[%s326 + $0x158] sm:$0xff]
        %v485 = vld [vmem:[%s326 + $0x168] sm:$0xff]
        %v486 = vld [vmem:[%s326 + $0x170] sm:$0xff]
        %v487 = vld [vmem:[%s326 + $0x1] sm:$0xff]
        %v488 = vld [vmem:[%s326 + $0x9] sm:$0xff]
        %v489 = vld [vmem:[%s326 + $0x19] sm:$0xff]
        %v490 = vld [vmem:[%s326 + $0x21] sm:$0xff]
        %v491 = vld [vmem:[%s326 + $0x31] sm:$0xff]
        %v492 = vld [vmem:[%s326 + $0x39] sm:$0xff]
        %v493 = vld [vmem:[%s326 + $0x49] sm:$0xff]
        %v494 = vld [vmem:[%s326 + $0x51] sm:$0xff]
        %v495 = vld [vmem:[%s326 + $0x61] sm:$0xff]
        %v496 = vld [vmem:[%s326 + $0x69] sm:$0xff]
        %v497 = vld [vmem:[%s326 + $0x79] sm:$0xff]
        %v498 = vld [vmem:[%s326 + $0x81] sm:$0xff]
        %v499 = vld [vmem:[%s326 + $0x91] sm:$0xff]
        %v500 = vld [vmem:[%s326 + $0x99] sm:$0xff]
        %v501 = vld [vmem:[%s326 + $0xa9] sm:$0xff]
        %v502 = vld [vmem:[%s326 + $0xb1] sm:$0xff]
        %v503 = vld [vmem:[%s326 + $0xc1] sm:$0xff]
        %v504 = vld [vmem:[%s326 + $0xc9] sm:$0xff]
        %v505 = vld [vmem:[%s326 + $0xd9] sm:$0xff]
        %v506 = vld [vmem:[%s326 + $0xe1] sm:$0xff]
        %v507 = vld [vmem:[%s326 + $0xf1] sm:$0xff]
        %v508 = vld [vmem:[%s326 + $0xf9] sm:$0xff]
        %v509 = vld [vmem:[%s326 + $0x109] sm:$0xff]
        %v510 = vld [vmem:[%s326 + $0x111] sm:$0xff]
        %v511 = vld [vmem:[%s326 + $0x121] sm:$0xff]
        %v512 = vld [vmem:[%s326 + $0x129] sm:$0xff]
        %v513 = vld [vmem:[%s326 + $0x139] sm:$0xff]
        %v514 = vld [vmem:[%s326 + $0x141] sm:$0xff]
        %v515 = vld [vmem:[%s326 + $0x151] sm:$0xff]
        %v516 = vld [vmem:[%s326 + $0x159] sm:$0xff]
        %v517 = vld [vmem:[%s326 + $0x169] sm:$0xff]
        %v518 = vld [vmem:[%s326 + $0x171] sm:$0xff]
        %v519 = vld [vmem:[%s326 + $0x2] sm:$0xff]
        %v520 = vld [vmem:[%s326 + $0xa] sm:$0xff]
        %v521 = vld [vmem:[%s326 + $0x1a] sm:$0xff]
        %v522 = vld [vmem:[%s326 + $0x22] sm:$0xff]
        %v523 = vld [vmem:[%s326 + $0x32] sm:$0xff]
        %v524 = vld [vmem:[%s326 + $0x3a] sm:$0xff]
        %v525 = vld [vmem:[%s326 + $0x4a] sm:$0xff]
        %v526 = vld [vmem:[%s326 + $0x52] sm:$0xff]
        %v527 = vld [vmem:[%s326 + $0x62] sm:$0xff]
        %v528 = vld [vmem:[%s326 + $0x6a] sm:$0xff]
        %v529 = vld [vmem:[%s326 + $0x7a] sm:$0xff]
        %v530 = vld [vmem:[%s326 + $0x82] sm:$0xff]
        %v531 = vld [vmem:[%s326 + $0x92] sm:$0xff]
        %v532 = vld [vmem:[%s326 + $0x9a] sm:$0xff]
        %v533 = vld [vmem:[%s326 + $0xaa] sm:$0xff]
        %v534 = vld [vmem:[%s326 + $0xb2] sm:$0xff]
        %v535 = vld [vmem:[%s326 + $0xc2] sm:$0xff]
        %v536 = vld [vmem:[%s326 + $0xca] sm:$0xff]
        %v537 = vld [vmem:[%s326 + $0xda] sm:$0xff]
        %v538 = vld [vmem:[%s326 + $0xe2] sm:$0xff]
        %v539 = vld [vmem:[%s326 + $0xf2] sm:$0xff]
        %v540 = vld [vmem:[%s326 + $0xfa] sm:$0xff]
        %v541 = vld [vmem:[%s326 + $0x10a] sm:$0xff]
        %v542 = vld [vmem:[%s326 + $0x112] sm:$0xff]
        %v543 = vld [vmem:[%s326 + $0x122] sm:$0xff]
        %v544 = vld [vmem:[%s326 + $0x12a] sm:$0xff]
        %v545 = vld [vmem:[%s326 + $0x13a] sm:$0xff]
        %v546 = vld [vmem:[%s326 + $0x142] sm:$0xff]
        %v547 = vld [vmem:[%s326 + $0x152] sm:$0xff]
        %v548 = vld [vmem:[%s326 + $0x15a] sm:$0xff]
        %v549 = vld [vmem:[%s326 + $0x16a] sm:$0xff]
        %v550 = vld [vmem:[%s326 + $0x172] sm:$0xff]
        %s551 = scalar_lea.vmem [#allocation2], 48
        %v552 = vld [vmem:[%s551] sm:$0xff]
        %v553 = vld [vmem:[%s551 + $0x8] sm:$0xff]
        %v554 = vld [vmem:[%s551 + $0x18] sm:$0xff]
        %v555 = vld [vmem:[%s551 + $0x20] sm:$0xff]
        %v556 = vld [vmem:[%s551 + $0x30] sm:$0xff]
        %v557 = vld [vmem:[%s551 + $0x38] sm:$0xff]
        %v558 = vld [vmem:[%s551 + $0x48] sm:$0xff]
        %v559 = vld [vmem:[%s551 + $0x50] sm:$0xff]
        %v560 = vld [vmem:[%s551 + $0x60] sm:$0xff]
        %v561 = vld [vmem:[%s551 + $0x68] sm:$0xff]
        %v562 = vld [vmem:[%s551 + $0x78] sm:$0xff]
        %v563 = vld [vmem:[%s551 + $0x80] sm:$0xff]
        %v564 = vld [vmem:[%s551 + $0x90] sm:$0xff]
        %v565 = vld [vmem:[%s551 + $0x98] sm:$0xff]
        %v566 = vld [vmem:[%s551 + $0xa8] sm:$0xff]
        %v567 = vld [vmem:[%s551 + $0xb0] sm:$0xff]
        %v568 = vld [vmem:[%s551 + $0xc0] sm:$0xff]
        %v569 = vld [vmem:[%s551 + $0xc8] sm:$0xff]
        %v570 = vld [vmem:[%s551 + $0xd8] sm:$0xff]
        %v571 = vld [vmem:[%s551 + $0xe0] sm:$0xff]
        %v572 = vld [vmem:[%s551 + $0xf0] sm:$0xff]
        %v573 = vld [vmem:[%s551 + $0xf8] sm:$0xff]
        %v574 = vld [vmem:[%s551 + $0x108] sm:$0xff]
        %v575 = vld [vmem:[%s551 + $0x110] sm:$0xff]
        %v576 = vld [vmem:[%s551 + $0x120] sm:$0xff]
        %v577 = vld [vmem:[%s551 + $0x128] sm:$0xff]
        %v578 = vld [vmem:[%s551 + $0x138] sm:$0xff]
        %v579 = vld [vmem:[%s551 + $0x140] sm:$0xff]
        %v580 = vld [vmem:[%s551 + $0x150] sm:$0xff]
        %v581 = vld [vmem:[%s551 + $0x158] sm:$0xff]
        %v582 = vld [vmem:[%s551 + $0x168] sm:$0xff]
        %v583 = vld [vmem:[%s551 + $0x170] sm:$0xff]
        %v584 = vld [vmem:[%s551 + $0x1] sm:$0xff]
        %v585 = vld [vmem:[%s551 + $0x9] sm:$0xff]
        %v586 = vld [vmem:[%s551 + $0x19] sm:$0xff]
        %v587 = vld [vmem:[%s551 + $0x21] sm:$0xff]
        %v588 = vld [vmem:[%s551 + $0x31] sm:$0xff]
        %v589 = vld [vmem:[%s551 + $0x39] sm:$0xff]
        %v590 = vld [vmem:[%s551 + $0x49] sm:$0xff]
        %v591 = vld [vmem:[%s551 + $0x51] sm:$0xff]
        %v592 = vld [vmem:[%s551 + $0x61] sm:$0xff]
        %v593 = vld [vmem:[%s551 + $0x69] sm:$0xff]
        %v594 = vld [vmem:[%s551 + $0x79] sm:$0xff]
        %v595 = vld [vmem:[%s551 + $0x81] sm:$0xff]
        %v596 = vld [vmem:[%s551 + $0x91] sm:$0xff]
        %v597 = vld [vmem:[%s551 + $0x99] sm:$0xff]
        %v598 = vld [vmem:[%s551 + $0xa9] sm:$0xff]
        %v599 = vld [vmem:[%s551 + $0xb1] sm:$0xff]
        %v600 = vld [vmem:[%s551 + $0xc1] sm:$0xff]
        %v601 = vld [vmem:[%s551 + $0xc9] sm:$0xff]
        %v602 = vld [vmem:[%s551 + $0xd9] sm:$0xff]
        %v603 = vld [vmem:[%s551 + $0xe1] sm:$0xff]
        %v604 = vld [vmem:[%s551 + $0xf1] sm:$0xff]
        %v605 = vld [vmem:[%s551 + $0xf9] sm:$0xff]
        %v606 = vld [vmem:[%s551 + $0x109] sm:$0xff]
        %v607 = vld [vmem:[%s551 + $0x111] sm:$0xff]
        %v608 = vld [vmem:[%s551 + $0x121] sm:$0xff]
        %v609 = vld [vmem:[%s551 + $0x129] sm:$0xff]
        %v610 = vld [vmem:[%s551 + $0x139] sm:$0xff]
        %v611 = vld [vmem:[%s551 + $0x141] sm:$0xff]
        %v612 = vld [vmem:[%s551 + $0x151] sm:$0xff]
        %v613 = vld [vmem:[%s551 + $0x159] sm:$0xff]
        %v614 = vld [vmem:[%s551 + $0x169] sm:$0xff]
        %v615 = vld [vmem:[%s551 + $0x171] sm:$0xff]
        %v616 = vld [vmem:[%s551 + $0x2] sm:$0xff]
        %v617 = vld [vmem:[%s551 + $0xa] sm:$0xff]
        %v618 = vld [vmem:[%s551 + $0x1a] sm:$0xff]
        %v619 = vld [vmem:[%s551 + $0x22] sm:$0xff]
        %v620 = vld [vmem:[%s551 + $0x32] sm:$0xff]
        %v621 = vld [vmem:[%s551 + $0x3a] sm:$0xff]
        %v622 = vld [vmem:[%s551 + $0x4a] sm:$0xff]
        %v623 = vld [vmem:[%s551 + $0x52] sm:$0xff]
        %v624 = vld [vmem:[%s551 + $0x62] sm:$0xff]
        %v625 = vld [vmem:[%s551 + $0x6a] sm:$0xff]
        %v626 = vld [vmem:[%s551 + $0x7a] sm:$0xff]
        %v627 = vld [vmem:[%s551 + $0x82] sm:$0xff]
        %v628 = vld [vmem:[%s551 + $0x92] sm:$0xff]
        %v629 = vld [vmem:[%s551 + $0x9a] sm:$0xff]
        %v630 = vld [vmem:[%s551 + $0xaa] sm:$0xff]
        %v631 = vld [vmem:[%s551 + $0xb2] sm:$0xff]
        %v632 = vld [vmem:[%s551 + $0xc2] sm:$0xff]
        %v633 = vld [vmem:[%s551 + $0xca] sm:$0xff]
        %v634 = vld [vmem:[%s551 + $0xda] sm:$0xff]
        %v635 = vld [vmem:[%s551 + $0xe2] sm:$0xff]
        %v636 = vld [vmem:[%s551 + $0xf2] sm:$0xff]
        %v637 = vld [vmem:[%s551 + $0xfa] sm:$0xff]
        %v638 = vld [vmem:[%s551 + $0x10a] sm:$0xff]
        %v639 = vld [vmem:[%s551 + $0x112] sm:$0xff]
        %v640 = vld [vmem:[%s551 + $0x122] sm:$0xff]
        %v641 = vld [vmem:[%s551 + $0x12a] sm:$0xff]
        %v642 = vld [vmem:[%s551 + $0x13a] sm:$0xff]
        %v643 = vld [vmem:[%s551 + $0x142] sm:$0xff]
        %v644 = vld [vmem:[%s551 + $0x152] sm:$0xff]
        %v645 = vld [vmem:[%s551 + $0x15a] sm:$0xff]
        %v646 = vld [vmem:[%s551 + $0x16a] sm:$0xff]
        %v647 = vld [vmem:[%s551 + $0x172] sm:$0xff]
        %v648 = vld [vmem:[#allocation5] sm:$0xff]
        %v649 = vld [vmem:[#allocation5 + $0x8] sm:$0xff]
        %v650 = vld [vmem:[#allocation5 + $0x10] sm:$0xff]
        %v651 = vld [vmem:[#allocation5 + $0x18] sm:$0xff]
        %v652 = vld [vmem:[#allocation5 + $0x20] sm:$0xff]
        %v653 = vld [vmem:[#allocation5 + $0x28] sm:$0xff]
        %v654 = vld [vmem:[#allocation5 + $0x30] sm:$0xff]
        %v655 = vld [vmem:[#allocation5 + $0x38] sm:$0xff]
        %v656 = vld [vmem:[#allocation5 + $0x40] sm:$0xff]
        %v657 = vld [vmem:[#allocation5 + $0x48] sm:$0xff]
        %v658 = vld [vmem:[#allocation5 + $0x50] sm:$0xff]
        %v659 = vld [vmem:[#allocation5 + $0x58] sm:$0xff]
        %v660 = vld [vmem:[#allocation5 + $0x60] sm:$0xff]
        %v661 = vld [vmem:[#allocation5 + $0x68] sm:$0xff]
        %v662 = vld [vmem:[#allocation5 + $0x70] sm:$0xff]
        %v663 = vld [vmem:[#allocation5 + $0x78] sm:$0xff]
        %v664 = vld [vmem:[#allocation5 + $0x80] sm:$0xff]
        %v665 = vld [vmem:[#allocation5 + $0x88] sm:$0xff]
        %v666 = vld [vmem:[#allocation5 + $0x90] sm:$0xff]
        %v667 = vld [vmem:[#allocation5 + $0x98] sm:$0xff]
        %v668 = vld [vmem:[#allocation5 + $0xa0] sm:$0xff]
        %v669 = vld [vmem:[#allocation5 + $0xa8] sm:$0xff]
        %v670 = vld [vmem:[#allocation5 + $0xb0] sm:$0xff]
        %v671 = vld [vmem:[#allocation5 + $0xb8] sm:$0xff]
        %v672 = vld [vmem:[#allocation5 + $0xc0] sm:$0xff]
        %v673 = vld [vmem:[#allocation5 + $0xc8] sm:$0xff]
        %v674 = vld [vmem:[#allocation5 + $0xd0] sm:$0xff]
        %v675 = vld [vmem:[#allocation5 + $0xd8] sm:$0xff]
        %v676 = vld [vmem:[#allocation5 + $0xe0] sm:$0xff]
        %v677 = vld [vmem:[#allocation5 + $0xe8] sm:$0xff]
        %v678 = vld [vmem:[#allocation5 + $0xf0] sm:$0xff]
        %v679 = vld [vmem:[#allocation5 + $0xf8] sm:$0xff]
        %v680 = vld [vmem:[#allocation5 + $0x100] sm:$0xff]
        %v681 = vld [vmem:[#allocation5 + $0x108] sm:$0xff]
        %v682 = vld [vmem:[#allocation5 + $0x110] sm:$0xff]
        %v683 = vld [vmem:[#allocation5 + $0x118] sm:$0xff]
        %v684 = vld [vmem:[#allocation5 + $0x120] sm:$0xff]
        %v685 = vld [vmem:[#allocation5 + $0x128] sm:$0xff]
        %v686 = vld [vmem:[#allocation5 + $0x130] sm:$0xff]
        %v687 = vld [vmem:[#allocation5 + $0x138] sm:$0xff]
        %v688 = vld [vmem:[#allocation5 + $0x140] sm:$0xff]
        %v689 = vld [vmem:[#allocation5 + $0x148] sm:$0xff]
        %v690 = vld [vmem:[#allocation5 + $0x150] sm:$0xff]
        %v691 = vld [vmem:[#allocation5 + $0x158] sm:$0xff]
        %v692 = vld [vmem:[#allocation5 + $0x160] sm:$0xff]
        %v693 = vld [vmem:[#allocation5 + $0x168] sm:$0xff]
        %v694 = vld [vmem:[#allocation5 + $0x170] sm:$0xff]
        %v695 = vld [vmem:[#allocation5 + $0x178] sm:$0xff]
        %v696 = vld [vmem:[#allocation5 + $0x180] sm:$0xff]
        %v697 = vld [vmem:[#allocation5 + $0x188] sm:$0xff]
        %v698 = vld [vmem:[#allocation5 + $0x190] sm:$0xff]
        %v699 = vld [vmem:[#allocation5 + $0x198] sm:$0xff]
        %v700 = vld [vmem:[#allocation5 + $0x1a0] sm:$0xff]
        %v701 = vld [vmem:[#allocation5 + $0x1a8] sm:$0xff]
        %v702 = vld [vmem:[#allocation5 + $0x1b0] sm:$0xff]
        %v703 = vld [vmem:[#allocation5 + $0x1b8] sm:$0xff]
        %v704 = vld [vmem:[#allocation5 + $0x1c0] sm:$0xff]
        %v705 = vld [vmem:[#allocation5 + $0x1c8] sm:$0xff]
        %v706 = vld [vmem:[#allocation5 + $0x1d0] sm:$0xff]
        %v707 = vld [vmem:[#allocation5 + $0x1d8] sm:$0xff]
        %v708 = vld [vmem:[#allocation5 + $0x1e0] sm:$0xff]
        %v709 = vld [vmem:[#allocation5 + $0x1e8] sm:$0xff]
        %v710 = vld [vmem:[#allocation5 + $0x1f0] sm:$0xff]
        %v711 = vld [vmem:[#allocation5 + $0x1f8] sm:$0xff]
        %v712 = vld [vmem:[#allocation5 + $0x200] sm:$0xff]
        %v713 = vld [vmem:[#allocation5 + $0x208] sm:$0xff]
        %v714 = vld [vmem:[#allocation5 + $0x210] sm:$0xff]
        %v715 = vld [vmem:[#allocation5 + $0x218] sm:$0xff]
        %v716 = vld [vmem:[#allocation5 + $0x220] sm:$0xff]
        %v717 = vld [vmem:[#allocation5 + $0x228] sm:$0xff]
        %v718 = vld [vmem:[#allocation5 + $0x230] sm:$0xff]
        %v719 = vld [vmem:[#allocation5 + $0x238] sm:$0xff]
        %v720 = vld [vmem:[#allocation5 + $0x240] sm:$0xff]
        %v721 = vld [vmem:[#allocation5 + $0x248] sm:$0xff]
        %v722 = vld [vmem:[#allocation5 + $0x250] sm:$0xff]
        %v723 = vld [vmem:[#allocation5 + $0x258] sm:$0xff]
        %v724 = vld [vmem:[#allocation5 + $0x260] sm:$0xff]
        %v725 = vld [vmem:[#allocation5 + $0x268] sm:$0xff]
        %v726 = vld [vmem:[#allocation5 + $0x270] sm:$0xff]
        %v727 = vld [vmem:[#allocation5 + $0x278] sm:$0xff]
        %v728 = vld [vmem:[#allocation5 + $0x280] sm:$0xff]
        %v729 = vld [vmem:[#allocation5 + $0x288] sm:$0xff]
        %v730 = vld [vmem:[#allocation5 + $0x290] sm:$0xff]
        %v731 = vld [vmem:[#allocation5 + $0x298] sm:$0xff]
        %v732 = vld [vmem:[#allocation5 + $0x2a0] sm:$0xff]
        %v733 = vld [vmem:[#allocation5 + $0x2a8] sm:$0xff]
        %v734 = vld [vmem:[#allocation5 + $0x2b0] sm:$0xff]
        %v735 = vld [vmem:[#allocation5 + $0x2b8] sm:$0xff]
        %v736 = vld [vmem:[#allocation5 + $0x2c0] sm:$0xff]
        %v737 = vld [vmem:[#allocation5 + $0x2c8] sm:$0xff]
        %v738 = vld [vmem:[#allocation5 + $0x2d0] sm:$0xff]
        %v739 = vld [vmem:[#allocation5 + $0x2d8] sm:$0xff]
        %v740 = vld [vmem:[#allocation5 + $0x2e0] sm:$0xff]
        %v741 = vld [vmem:[#allocation5 + $0x2e8] sm:$0xff]
        %v742 = vld [vmem:[#allocation5 + $0x2f0] sm:$0xff]
        %v743 = vld [vmem:[#allocation5 + $0x2f8] sm:$0xff]
        %v744 = vld [vmem:[#allocation5 + $0x300] sm:$0xff]
        %v745 = vld [vmem:[#allocation5 + $0x308] sm:$0xff]
        %v746 = vld [vmem:[#allocation5 + $0x310] sm:$0xff]
        %v747 = vld [vmem:[#allocation5 + $0x318] sm:$0xff]
        %v748 = vld [vmem:[#allocation5 + $0x320] sm:$0xff]
        %v749 = vld [vmem:[#allocation5 + $0x328] sm:$0xff]
        %v750 = vld [vmem:[#allocation5 + $0x330] sm:$0xff]
        %v751 = vld [vmem:[#allocation5 + $0x338] sm:$0xff]
        %v752 = vld [vmem:[#allocation5 + $0x340] sm:$0xff]
        %v753 = vld [vmem:[#allocation5 + $0x348] sm:$0xff]
        %v754 = vld [vmem:[#allocation5 + $0x350] sm:$0xff]
        %v755 = vld [vmem:[#allocation5 + $0x358] sm:$0xff]
        %v756 = vld [vmem:[#allocation5 + $0x360] sm:$0xff]
        %v757 = vld [vmem:[#allocation5 + $0x368] sm:$0xff]
        %v758 = vld [vmem:[#allocation5 + $0x370] sm:$0xff]
        %v759 = vld [vmem:[#allocation5 + $0x378] sm:$0xff]
        %v760 = vld [vmem:[#allocation5 + $0x380] sm:$0xff]
        %v761 = vld [vmem:[#allocation5 + $0x388] sm:$0xff]
        %v762 = vld [vmem:[#allocation5 + $0x390] sm:$0xff]
        %v763 = vld [vmem:[#allocation5 + $0x398] sm:$0xff]
        %v764 = vld [vmem:[#allocation5 + $0x3a0] sm:$0xff]
        %v765 = vld [vmem:[#allocation5 + $0x3a8] sm:$0xff]
        %v766 = vld [vmem:[#allocation5 + $0x3b0] sm:$0xff]
        %v767 = vld [vmem:[#allocation5 + $0x3b8] sm:$0xff]
        %v768 = vld [vmem:[#allocation5 + $0x3c0] sm:$0xff]
        %v769 = vld [vmem:[#allocation5 + $0x3c8] sm:$0xff]
        %v770 = vld [vmem:[#allocation5 + $0x3d0] sm:$0xff]
        %v771 = vld [vmem:[#allocation5 + $0x3d8] sm:$0xff]
        %v772 = vld [vmem:[#allocation5 + $0x3e0] sm:$0xff]
        %v773 = vld [vmem:[#allocation5 + $0x3e8] sm:$0xff]
        %v774 = vld [vmem:[#allocation5 + $0x3f0] sm:$0xff]
        %v775 = vld [vmem:[#allocation5 + $0x3f8] sm:$0xff]
        %v776 = vld [vmem:[#allocation5 + $0x400] sm:$0xff]
        %v777 = vld [vmem:[#allocation5 + $0x408] sm:$0xff]
        %v778 = vld [vmem:[#allocation5 + $0x410] sm:$0xff]
        %v779 = vld [vmem:[#allocation5 + $0x418] sm:$0xff]
        %v780 = vld [vmem:[#allocation5 + $0x420] sm:$0xff]
        %v781 = vld [vmem:[#allocation5 + $0x428] sm:$0xff]
        %v782 = vld [vmem:[#allocation5 + $0x430] sm:$0xff]
        %v783 = vld [vmem:[#allocation5 + $0x438] sm:$0xff]
        %v784 = vld [vmem:[#allocation5 + $0x440] sm:$0xff]
        %v785 = vld [vmem:[#allocation5 + $0x448] sm:$0xff]
        %v786 = vld [vmem:[#allocation5 + $0x450] sm:$0xff]
        %v787 = vld [vmem:[#allocation5 + $0x458] sm:$0xff]
        %v788 = vld [vmem:[#allocation5 + $0x460] sm:$0xff]
        %v789 = vld [vmem:[#allocation5 + $0x468] sm:$0xff]
        %v790 = vld [vmem:[#allocation5 + $0x470] sm:$0xff]
        %v791 = vld [vmem:[#allocation5 + $0x478] sm:$0xff]
        %v792 = vld [vmem:[%s2] sm:$0x1]
        %v794 = vperm.slane %v792, 0
        %796 = vmatpush.msra.mxu0 %v663
        %797 = vmatpush.msra.mxu0 %v662
        %798 = vmatpush.msra.mxu0 %v661
        %799 = vmatpush.msra.mxu0 %v660
        %800 = vmatpush.msra.mxu0 %v659
        %801 = vmatpush.msra.mxu0 %v658
        %802 = vmatpush.msra.mxu0 %v657
        %803 = vmatpush.msra.mxu0 %v656
        %804 = vmatpush.msra.mxu0 %v655
        %805 = vmatpush.msra.mxu0 %v654
        %806 = vmatpush.msra.mxu0 %v653
        %807 = vmatpush.msra.mxu0 %v652
        %808 = vmatpush.msra.mxu0 %v651
        %809 = vmatpush.msra.mxu0 %v650
        %810 = vmatpush.msra.mxu0 %v649
        %811 = vmatpush.msra.mxu0 %v648
        %812 = vmatmul.f32.gmra.mxu0 %v359
        %v813 = vpop.f32.mrf.mxu0
        %v814 = vadd.f32 %v794, %v813
        %815 = vmatmul.f32.gmra.mxu0 %v360
        %v816 = vpop.f32.mrf.mxu0
        %v817 = vadd.f32 %v794, %v816
        %818 = vmatmul.f32.gmra.mxu0 %v361
        %v819 = vpop.f32.mrf.mxu0
        %v820 = vadd.f32 %v794, %v819
        %821 = vmatmul.f32.gmra.mxu0 %v362
        %v822 = vpop.f32.mrf.mxu0
        %v823 = vadd.f32 %v794, %v822
        %824 = vmatmul.f32.gmra.mxu0 %v363
        %v825 = vpop.f32.mrf.mxu0
        %v826 = vadd.f32 %v794, %v825
        %827 = vmatmul.f32.gmra.mxu0 %v364
        %v828 = vpop.f32.mrf.mxu0
        %v829 = vadd.f32 %v794, %v828
        %830 = vmatmul.f32.gmra.mxu0 %v365
        %v831 = vpop.f32.mrf.mxu0
        %v832 = vadd.f32 %v794, %v831
        %833 = vmatmul.f32.gmra.mxu0 %v366
        %v834 = vpop.f32.mrf.mxu0
        %v835 = vadd.f32 %v794, %v834
        %836 = vmatmul.f32.gmra.mxu0 %v367
        %v837 = vpop.f32.mrf.mxu0
        %v838 = vadd.f32 %v794, %v837
        %839 = vmatmul.f32.gmra.mxu0 %v368
        %v840 = vpop.f32.mrf.mxu0
        %v841 = vadd.f32 %v794, %v840
        %842 = vmatmul.f32.gmra.mxu0 %v369
        %v843 = vpop.f32.mrf.mxu0
        %v844 = vadd.f32 %v794, %v843
        %845 = vmatmul.f32.gmra.mxu0 %v370
        %v846 = vpop.f32.mrf.mxu0
        %v847 = vadd.f32 %v794, %v846
        %848 = vmatmul.f32.gmra.mxu0 %v371
        %v849 = vpop.f32.mrf.mxu0
        %v850 = vadd.f32 %v794, %v849
        %851 = vmatmul.f32.gmra.mxu0 %v372
        %v852 = vpop.f32.mrf.mxu0
        %v853 = vadd.f32 %v794, %v852
        %854 = vmatmul.f32.gmra.mxu0 %v373
        %v855 = vpop.f32.mrf.mxu0
        %v856 = vadd.f32 %v794, %v855
        %857 = vmatmul.f32.gmra.mxu0 %v374
        %v858 = vpop.f32.mrf.mxu0
        %v859 = vadd.f32 %v794, %v858
        %860 = vmatmul.f32.gmra.mxu0 %v375
        %v861 = vpop.f32.mrf.mxu0
        %v862 = vadd.f32 %v794, %v861
        %863 = vmatmul.f32.gmra.mxu0 %v376
        %v864 = vpop.f32.mrf.mxu0
        %v865 = vadd.f32 %v794, %v864
        %866 = vmatmul.f32.gmra.mxu0 %v377
        %v867 = vpop.f32.mrf.mxu0
        %v868 = vadd.f32 %v794, %v867
        %869 = vmatmul.f32.gmra.mxu0 %v378
        %v870 = vpop.f32.mrf.mxu0
        %v871 = vadd.f32 %v794, %v870
        %872 = vmatmul.f32.gmra.mxu0 %v379
        %v873 = vpop.f32.mrf.mxu0
        %v874 = vadd.f32 %v794, %v873
        %875 = vmatmul.f32.gmra.mxu0 %v380
        %v876 = vpop.f32.mrf.mxu0
        %v877 = vadd.f32 %v794, %v876
        %878 = vmatmul.f32.gmra.mxu0 %v381
        %v879 = vpop.f32.mrf.mxu0
        %v880 = vadd.f32 %v794, %v879
        %881 = vmatmul.f32.gmra.mxu0 %v382
        %v882 = vpop.f32.mrf.mxu0
        %v883 = vadd.f32 %v794, %v882
        %884 = vmatmul.f32.gmra.mxu0 %v383
        %v885 = vpop.f32.mrf.mxu0
        %v886 = vadd.f32 %v794, %v885
        %887 = vmatmul.f32.gmra.mxu0 %v384
        %v888 = vpop.f32.mrf.mxu0
        %v889 = vadd.f32 %v794, %v888
        %890 = vmatmul.f32.gmra.mxu0 %v385
        %v891 = vpop.f32.mrf.mxu0
        %v892 = vadd.f32 %v794, %v891
        %893 = vmatmul.f32.gmra.mxu0 %v386
        %v894 = vpop.f32.mrf.mxu0
        %v895 = vadd.f32 %v794, %v894
        %896 = vmatmul.f32.gmra.mxu0 %v387
        %v897 = vpop.f32.mrf.mxu0
        %v898 = vadd.f32 %v794, %v897
        %899 = vmatmul.f32.gmra.mxu0 %v388
        %v900 = vpop.f32.mrf.mxu0
        %v901 = vadd.f32 %v794, %v900
        %902 = vmatmul.f32.gmra.mxu0 %v389
        %v903 = vpop.f32.mrf.mxu0
        %v904 = vadd.f32 %v794, %v903
        %905 = vmatmul.f32.gmra.mxu0 %v390
        %v906 = vpop.f32.mrf.mxu0
        %v907 = vadd.f32 %v794, %v906
        %908 = vdwg.mxu0
        %909 = vmatpush.msra.mxu0 %v679
        %910 = vmatpush.msra.mxu0 %v678
        %911 = vmatpush.msra.mxu0 %v677
        %912 = vmatpush.msra.mxu0 %v676
        %913 = vmatpush.msra.mxu0 %v675
        %914 = vmatpush.msra.mxu0 %v674
        %915 = vmatpush.msra.mxu0 %v673
        %916 = vmatpush.msra.mxu0 %v672
        %917 = vmatpush.msra.mxu0 %v671
        %918 = vmatpush.msra.mxu0 %v670
        %919 = vmatpush.msra.mxu0 %v669
        %920 = vmatpush.msra.mxu0 %v668
        %921 = vmatpush.msra.mxu0 %v667
        %922 = vmatpush.msra.mxu0 %v666
        %923 = vmatpush.msra.mxu0 %v665
        %924 = vmatpush.msra.mxu0 %v664
        %925 = vmatmul.f32.gmra.mxu0 %v391
        %v926 = vpop.f32.mrf.mxu0
        %v927 = vadd.f32 %v814, %v926
        %928 = vmatmul.f32.gmra.mxu0 %v392
        %v929 = vpop.f32.mrf.mxu0
        %v930 = vadd.f32 %v817, %v929
        %931 = vmatmul.f32.gmra.mxu0 %v393
        %v932 = vpop.f32.mrf.mxu0
        %v933 = vadd.f32 %v820, %v932
        %934 = vmatmul.f32.gmra.mxu0 %v394
        %v935 = vpop.f32.mrf.mxu0
        %v936 = vadd.f32 %v823, %v935
        %937 = vmatmul.f32.gmra.mxu0 %v395
        %v938 = vpop.f32.mrf.mxu0
        %v939 = vadd.f32 %v826, %v938
        %940 = vmatmul.f32.gmra.mxu0 %v396
        %v941 = vpop.f32.mrf.mxu0
        %v942 = vadd.f32 %v829, %v941
        %943 = vmatmul.f32.gmra.mxu0 %v397
        %v944 = vpop.f32.mrf.mxu0
        %v945 = vadd.f32 %v832, %v944
        %946 = vmatmul.f32.gmra.mxu0 %v398
        %v947 = vpop.f32.mrf.mxu0
        %v948 = vadd.f32 %v835, %v947
        %949 = vmatmul.f32.gmra.mxu0 %v399
        %v950 = vpop.f32.mrf.mxu0
        %v951 = vadd.f32 %v838, %v950
        %952 = vmatmul.f32.gmra.mxu0 %v400
        %v953 = vpop.f32.mrf.mxu0
        %v954 = vadd.f32 %v841, %v953
        %955 = vmatmul.f32.gmra.mxu0 %v401
        %v956 = vpop.f32.mrf.mxu0
        %v957 = vadd.f32 %v844, %v956
        %958 = vmatmul.f32.gmra.mxu0 %v402
        %v959 = vpop.f32.mrf.mxu0
        %v960 = vadd.f32 %v847, %v959
        %961 = vmatmul.f32.gmra.mxu0 %v403
        %v962 = vpop.f32.mrf.mxu0
        %v963 = vadd.f32 %v850, %v962
        %964 = vmatmul.f32.gmra.mxu0 %v404
        %v965 = vpop.f32.mrf.mxu0
        %v966 = vadd.f32 %v853, %v965
        %967 = vmatmul.f32.gmra.mxu0 %v405
        %v968 = vpop.f32.mrf.mxu0
        %v969 = vadd.f32 %v856, %v968
        %970 = vmatmul.f32.gmra.mxu0 %v406
        %v971 = vpop.f32.mrf.mxu0
        %v972 = vadd.f32 %v859, %v971
        %973 = vmatmul.f32.gmra.mxu0 %v407
        %v974 = vpop.f32.mrf.mxu0
        %v975 = vadd.f32 %v862, %v974
        %976 = vmatmul.f32.gmra.mxu0 %v408
        %v977 = vpop.f32.mrf.mxu0
        %v978 = vadd.f32 %v865, %v977
        %979 = vmatmul.f32.gmra.mxu0 %v409
        %v980 = vpop.f32.mrf.mxu0
        %v981 = vadd.f32 %v868, %v980
        %982 = vmatmul.f32.gmra.mxu0 %v410
        %v983 = vpop.f32.mrf.mxu0
        %v984 = vadd.f32 %v871, %v983
        %985 = vmatmul.f32.gmra.mxu0 %v411
        %v986 = vpop.f32.mrf.mxu0
        %v987 = vadd.f32 %v874, %v986
        %988 = vmatmul.f32.gmra.mxu0 %v412
        %v989 = vpop.f32.mrf.mxu0
        %v990 = vadd.f32 %v877, %v989
        %991 = vmatmul.f32.gmra.mxu0 %v413
        %v992 = vpop.f32.mrf.mxu0
        %v993 = vadd.f32 %v880, %v992
        %994 = vmatmul.f32.gmra.mxu0 %v414
        %v995 = vpop.f32.mrf.mxu0
        %v996 = vadd.f32 %v883, %v995
        %997 = vmatmul.f32.gmra.mxu0 %v415
        %v998 = vpop.f32.mrf.mxu0
        %v999 = vadd.f32 %v886, %v998
        %1000 = vmatmul.f32.gmra.mxu0 %v416
        %v1001 = vpop.f32.mrf.mxu0
        %v1002 = vadd.f32 %v889, %v1001
        %1003 = vmatmul.f32.gmra.mxu0 %v417
        %v1004 = vpop.f32.mrf.mxu0
        %v1005 = vadd.f32 %v892, %v1004
        %1006 = vmatmul.f32.gmra.mxu0 %v418
        %v1007 = vpop.f32.mrf.mxu0
        %v1008 = vadd.f32 %v895, %v1007
        %1009 = vmatmul.f32.gmra.mxu0 %v419
        %v1010 = vpop.f32.mrf.mxu0
        %v1011 = vadd.f32 %v898, %v1010
        %1012 = vmatmul.f32.gmra.mxu0 %v420
        %v1013 = vpop.f32.mrf.mxu0
        %v1014 = vadd.f32 %v901, %v1013
        %1015 = vmatmul.f32.gmra.mxu0 %v421
        %v1016 = vpop.f32.mrf.mxu0
        %v1017 = vadd.f32 %v904, %v1016
        %1018 = vmatmul.f32.gmra.mxu0 %v422
        %v1019 = vpop.f32.mrf.mxu0
        %v1020 = vadd.f32 %v907, %v1019
        %1021 = vdwg.mxu0
        %1022 = vmatpush.msra.mxu0 %v695
        %1023 = vmatpush.msra.mxu0 %v694
        %1024 = vmatpush.msra.mxu0 %v693
        %1025 = vmatpush.msra.mxu0 %v692
        %1026 = vmatpush.msra.mxu0 %v691
        %1027 = vmatpush.msra.mxu0 %v690
        %1028 = vmatpush.msra.mxu0 %v689
        %1029 = vmatpush.msra.mxu0 %v688
        %1030 = vmatpush.msra.mxu0 %v687
        %1031 = vmatpush.msra.mxu0 %v686
        %1032 = vmatpush.msra.mxu0 %v685
        %1033 = vmatpush.msra.mxu0 %v684
        %1034 = vmatpush.msra.mxu0 %v683
        %1035 = vmatpush.msra.mxu0 %v682
        %1036 = vmatpush.msra.mxu0 %v681
        %1037 = vmatpush.msra.mxu0 %v680
        %1038 = vmatmul.f32.gmra.mxu0 %v423
        %v1039 = vpop.f32.mrf.mxu0
        %v1040 = vadd.f32 %v927, %v1039
        %1041 = vmatmul.f32.gmra.mxu0 %v424
        %v1042 = vpop.f32.mrf.mxu0
        %v1043 = vadd.f32 %v930, %v1042
        %1044 = vmatmul.f32.gmra.mxu0 %v425
        %v1045 = vpop.f32.mrf.mxu0
        %v1046 = vadd.f32 %v933, %v1045
        %1047 = vmatmul.f32.gmra.mxu0 %v426
        %v1048 = vpop.f32.mrf.mxu0
        %v1049 = vadd.f32 %v936, %v1048
        %1050 = vmatmul.f32.gmra.mxu0 %v427
        %v1051 = vpop.f32.mrf.mxu0
        %v1052 = vadd.f32 %v939, %v1051
        %1053 = vmatmul.f32.gmra.mxu0 %v428
        %v1054 = vpop.f32.mrf.mxu0
        %v1055 = vadd.f32 %v942, %v1054
        %1056 = vmatmul.f32.gmra.mxu0 %v429
        %v1057 = vpop.f32.mrf.mxu0
        %v1058 = vadd.f32 %v945, %v1057
        %1059 = vmatmul.f32.gmra.mxu0 %v430
        %v1060 = vpop.f32.mrf.mxu0
        %v1061 = vadd.f32 %v948, %v1060
        %1062 = vmatmul.f32.gmra.mxu0 %v431
        %v1063 = vpop.f32.mrf.mxu0
        %v1064 = vadd.f32 %v951, %v1063
        %1065 = vmatmul.f32.gmra.mxu0 %v432
        %v1066 = vpop.f32.mrf.mxu0
        %v1067 = vadd.f32 %v954, %v1066
        %1068 = vmatmul.f32.gmra.mxu0 %v433
        %v1069 = vpop.f32.mrf.mxu0
        %v1070 = vadd.f32 %v957, %v1069
        %1071 = vmatmul.f32.gmra.mxu0 %v434
        %v1072 = vpop.f32.mrf.mxu0
        %v1073 = vadd.f32 %v960, %v1072
        %1074 = vmatmul.f32.gmra.mxu0 %v435
        %v1075 = vpop.f32.mrf.mxu0
        %v1076 = vadd.f32 %v963, %v1075
        %1077 = vmatmul.f32.gmra.mxu0 %v436
        %v1078 = vpop.f32.mrf.mxu0
        %v1079 = vadd.f32 %v966, %v1078
        %1080 = vmatmul.f32.gmra.mxu0 %v437
        %v1081 = vpop.f32.mrf.mxu0
        %v1082 = vadd.f32 %v969, %v1081
        %1083 = vmatmul.f32.gmra.mxu0 %v438
        %v1084 = vpop.f32.mrf.mxu0
        %v1085 = vadd.f32 %v972, %v1084
        %1086 = vmatmul.f32.gmra.mxu0 %v439
        %v1087 = vpop.f32.mrf.mxu0
        %v1088 = vadd.f32 %v975, %v1087
        %1089 = vmatmul.f32.gmra.mxu0 %v440
        %v1090 = vpop.f32.mrf.mxu0
        %v1091 = vadd.f32 %v978, %v1090
        %1092 = vmatmul.f32.gmra.mxu0 %v441
        %v1093 = vpop.f32.mrf.mxu0
        %v1094 = vadd.f32 %v981, %v1093
        %1095 = vmatmul.f32.gmra.mxu0 %v442
        %v1096 = vpop.f32.mrf.mxu0
        %v1097 = vadd.f32 %v984, %v1096
        %1098 = vmatmul.f32.gmra.mxu0 %v443
        %v1099 = vpop.f32.mrf.mxu0
        %v1100 = vadd.f32 %v987, %v1099
        %1101 = vmatmul.f32.gmra.mxu0 %v444
        %v1102 = vpop.f32.mrf.mxu0
        %v1103 = vadd.f32 %v990, %v1102
        %1104 = vmatmul.f32.gmra.mxu0 %v445
        %v1105 = vpop.f32.mrf.mxu0
        %v1106 = vadd.f32 %v993, %v1105
        %1107 = vmatmul.f32.gmra.mxu0 %v446
        %v1108 = vpop.f32.mrf.mxu0
        %v1109 = vadd.f32 %v996, %v1108
        %1110 = vmatmul.f32.gmra.mxu0 %v447
        %v1111 = vpop.f32.mrf.mxu0
        %v1112 = vadd.f32 %v999, %v1111
        %1113 = vmatmul.f32.gmra.mxu0 %v448
        %v1114 = vpop.f32.mrf.mxu0
        %v1115 = vadd.f32 %v1002, %v1114
        %1116 = vmatmul.f32.gmra.mxu0 %v449
        %v1117 = vpop.f32.mrf.mxu0
        %v1118 = vadd.f32 %v1005, %v1117
        %1119 = vmatmul.f32.gmra.mxu0 %v450
        %v1120 = vpop.f32.mrf.mxu0
        %v1121 = vadd.f32 %v1008, %v1120
        %1122 = vmatmul.f32.gmra.mxu0 %v451
        %v1123 = vpop.f32.mrf.mxu0
        %v1124 = vadd.f32 %v1011, %v1123
        %1125 = vmatmul.f32.gmra.mxu0 %v452
        %v1126 = vpop.f32.mrf.mxu0
        %v1127 = vadd.f32 %v1014, %v1126
        %1128 = vmatmul.f32.gmra.mxu0 %v453
        %v1129 = vpop.f32.mrf.mxu0
        %v1130 = vadd.f32 %v1017, %v1129
        %1131 = vmatmul.f32.gmra.mxu0 %v454
        %v1132 = vpop.f32.mrf.mxu0
        %v1133 = vadd.f32 %v1020, %v1132
        %1134 = vdwg.mxu0
        %1135 = vmatpush.msra.mxu0 %v711
        %1136 = vmatpush.msra.mxu0 %v710
        %1137 = vmatpush.msra.mxu0 %v709
        %1138 = vmatpush.msra.mxu0 %v708
        %1139 = vmatpush.msra.mxu0 %v707
        %1140 = vmatpush.msra.mxu0 %v706
        %1141 = vmatpush.msra.mxu0 %v705
        %1142 = vmatpush.msra.mxu0 %v704
        %1143 = vmatpush.msra.mxu0 %v703
        %1144 = vmatpush.msra.mxu0 %v702
        %1145 = vmatpush.msra.mxu0 %v701
        %1146 = vmatpush.msra.mxu0 %v700
        %1147 = vmatpush.msra.mxu0 %v699
        %1148 = vmatpush.msra.mxu0 %v698
        %1149 = vmatpush.msra.mxu0 %v697
        %1150 = vmatpush.msra.mxu0 %v696
        %1151 = vmatmul.f32.gmra.mxu0 %v455
        %v1152 = vpop.f32.mrf.mxu0
        %v1153 = vadd.f32 %v1040, %v1152
        %1154 = vmatmul.f32.gmra.mxu0 %v456
        %v1155 = vpop.f32.mrf.mxu0
        %v1156 = vadd.f32 %v1043, %v1155
        %1157 = vmatmul.f32.gmra.mxu0 %v457
        %v1158 = vpop.f32.mrf.mxu0
        %v1159 = vadd.f32 %v1046, %v1158
        %1160 = vmatmul.f32.gmra.mxu0 %v458
        %v1161 = vpop.f32.mrf.mxu0
        %v1162 = vadd.f32 %v1049, %v1161
        %1163 = vmatmul.f32.gmra.mxu0 %v459
        %v1164 = vpop.f32.mrf.mxu0
        %v1165 = vadd.f32 %v1052, %v1164
        %1166 = vmatmul.f32.gmra.mxu0 %v460
        %v1167 = vpop.f32.mrf.mxu0
        %v1168 = vadd.f32 %v1055, %v1167
        %1169 = vmatmul.f32.gmra.mxu0 %v461
        %v1170 = vpop.f32.mrf.mxu0
        %v1171 = vadd.f32 %v1058, %v1170
        %1172 = vmatmul.f32.gmra.mxu0 %v462
        %v1173 = vpop.f32.mrf.mxu0
        %v1174 = vadd.f32 %v1061, %v1173
        %1175 = vmatmul.f32.gmra.mxu0 %v463
        %v1176 = vpop.f32.mrf.mxu0
        %v1177 = vadd.f32 %v1064, %v1176
        %1178 = vmatmul.f32.gmra.mxu0 %v464
        %v1179 = vpop.f32.mrf.mxu0
        %v1180 = vadd.f32 %v1067, %v1179
        %1181 = vmatmul.f32.gmra.mxu0 %v465
        %v1182 = vpop.f32.mrf.mxu0
        %v1183 = vadd.f32 %v1070, %v1182
        %1184 = vmatmul.f32.gmra.mxu0 %v466
        %v1185 = vpop.f32.mrf.mxu0
        %v1186 = vadd.f32 %v1073, %v1185
        %1187 = vmatmul.f32.gmra.mxu0 %v467
        %v1188 = vpop.f32.mrf.mxu0
        %v1189 = vadd.f32 %v1076, %v1188
        %1190 = vmatmul.f32.gmra.mxu0 %v468
        %v1191 = vpop.f32.mrf.mxu0
        %v1192 = vadd.f32 %v1079, %v1191
        %1193 = vmatmul.f32.gmra.mxu0 %v469
        %v1194 = vpop.f32.mrf.mxu0
        %v1195 = vadd.f32 %v1082, %v1194
        %1196 = vmatmul.f32.gmra.mxu0 %v470
        %v1197 = vpop.f32.mrf.mxu0
        %v1198 = vadd.f32 %v1085, %v1197
        %1199 = vmatmul.f32.gmra.mxu0 %v471
        %v1200 = vpop.f32.mrf.mxu0
        %v1201 = vadd.f32 %v1088, %v1200
        %1202 = vmatmul.f32.gmra.mxu0 %v472
        %v1203 = vpop.f32.mrf.mxu0
        %v1204 = vadd.f32 %v1091, %v1203
        %1205 = vmatmul.f32.gmra.mxu0 %v473
        %v1206 = vpop.f32.mrf.mxu0
        %v1207 = vadd.f32 %v1094, %v1206
        %1208 = vmatmul.f32.gmra.mxu0 %v474
        %v1209 = vpop.f32.mrf.mxu0
        %v1210 = vadd.f32 %v1097, %v1209
        %1211 = vmatmul.f32.gmra.mxu0 %v475
        %v1212 = vpop.f32.mrf.mxu0
        %v1213 = vadd.f32 %v1100, %v1212
        %1214 = vmatmul.f32.gmra.mxu0 %v476
        %v1215 = vpop.f32.mrf.mxu0
        %v1216 = vadd.f32 %v1103, %v1215
        %1217 = vmatmul.f32.gmra.mxu0 %v477
        %v1218 = vpop.f32.mrf.mxu0
        %v1219 = vadd.f32 %v1106, %v1218
        %1220 = vmatmul.f32.gmra.mxu0 %v478
        %v1221 = vpop.f32.mrf.mxu0
        %v1222 = vadd.f32 %v1109, %v1221
        %1223 = vmatmul.f32.gmra.mxu0 %v479
        %v1224 = vpop.f32.mrf.mxu0
        %v1225 = vadd.f32 %v1112, %v1224
        %1226 = vmatmul.f32.gmra.mxu0 %v480
        %v1227 = vpop.f32.mrf.mxu0
        %v1228 = vadd.f32 %v1115, %v1227
        %1229 = vmatmul.f32.gmra.mxu0 %v481
        %v1230 = vpop.f32.mrf.mxu0
        %v1231 = vadd.f32 %v1118, %v1230
        %1232 = vmatmul.f32.gmra.mxu0 %v482
        %v1233 = vpop.f32.mrf.mxu0
        %v1234 = vadd.f32 %v1121, %v1233
        %1235 = vmatmul.f32.gmra.mxu0 %v483
        %v1236 = vpop.f32.mrf.mxu0
        %v1237 = vadd.f32 %v1124, %v1236
        %1238 = vmatmul.f32.gmra.mxu0 %v484
        %v1239 = vpop.f32.mrf.mxu0
        %v1240 = vadd.f32 %v1127, %v1239
        %1241 = vmatmul.f32.gmra.mxu0 %v485
        %v1242 = vpop.f32.mrf.mxu0
        %v1243 = vadd.f32 %v1130, %v1242
        %1244 = vmatmul.f32.gmra.mxu0 %v486
        %v1245 = vpop.f32.mrf.mxu0
        %v1246 = vadd.f32 %v1133, %v1245
        %1247 = vdwg.mxu0
        %1248 = vmatpush.msra.mxu0 %v727
        %1249 = vmatpush.msra.mxu0 %v726
        %1250 = vmatpush.msra.mxu0 %v725
        %1251 = vmatpush.msra.mxu0 %v724
        %1252 = vmatpush.msra.mxu0 %v723
        %1253 = vmatpush.msra.mxu0 %v722
        %1254 = vmatpush.msra.mxu0 %v721
        %1255 = vmatpush.msra.mxu0 %v720
        %1256 = vmatpush.msra.mxu0 %v719
        %1257 = vmatpush.msra.mxu0 %v718
        %1258 = vmatpush.msra.mxu0 %v717
        %1259 = vmatpush.msra.mxu0 %v716
        %1260 = vmatpush.msra.mxu0 %v715
        %1261 = vmatpush.msra.mxu0 %v714
        %1262 = vmatpush.msra.mxu0 %v713
        %1263 = vmatpush.msra.mxu0 %v712
        %1264 = vmatmul.f32.gmra.mxu0 %v487
        %v1265 = vpop.f32.mrf.mxu0
        %v1266 = vadd.f32 %v1153, %v1265
        %1267 = vmatmul.f32.gmra.mxu0 %v488
        %v1268 = vpop.f32.mrf.mxu0
        %v1269 = vadd.f32 %v1156, %v1268
        %1270 = vmatmul.f32.gmra.mxu0 %v489
        %v1271 = vpop.f32.mrf.mxu0
        %v1272 = vadd.f32 %v1159, %v1271
        %1273 = vmatmul.f32.gmra.mxu0 %v490
        %v1274 = vpop.f32.mrf.mxu0
        %v1275 = vadd.f32 %v1162, %v1274
        %1276 = vmatmul.f32.gmra.mxu0 %v491
        %v1277 = vpop.f32.mrf.mxu0
        %v1278 = vadd.f32 %v1165, %v1277
        %1279 = vmatmul.f32.gmra.mxu0 %v492
        %v1280 = vpop.f32.mrf.mxu0
        %v1281 = vadd.f32 %v1168, %v1280
        %1282 = vmatmul.f32.gmra.mxu0 %v493
        %v1283 = vpop.f32.mrf.mxu0
        %v1284 = vadd.f32 %v1171, %v1283
        %1285 = vmatmul.f32.gmra.mxu0 %v494
        %v1286 = vpop.f32.mrf.mxu0
        %v1287 = vadd.f32 %v1174, %v1286
        %1288 = vmatmul.f32.gmra.mxu0 %v495
        %v1289 = vpop.f32.mrf.mxu0
        %v1290 = vadd.f32 %v1177, %v1289
        %1291 = vmatmul.f32.gmra.mxu0 %v496
        %v1292 = vpop.f32.mrf.mxu0
        %v1293 = vadd.f32 %v1180, %v1292
        %1294 = vmatmul.f32.gmra.mxu0 %v497
        %v1295 = vpop.f32.mrf.mxu0
        %v1296 = vadd.f32 %v1183, %v1295
        %1297 = vmatmul.f32.gmra.mxu0 %v498
        %v1298 = vpop.f32.mrf.mxu0
        %v1299 = vadd.f32 %v1186, %v1298
        %1300 = vmatmul.f32.gmra.mxu0 %v499
        %v1301 = vpop.f32.mrf.mxu0
        %v1302 = vadd.f32 %v1189, %v1301
        %1303 = vmatmul.f32.gmra.mxu0 %v500
        %v1304 = vpop.f32.mrf.mxu0
        %v1305 = vadd.f32 %v1192, %v1304
        %1306 = vmatmul.f32.gmra.mxu0 %v501
        %v1307 = vpop.f32.mrf.mxu0
        %v1308 = vadd.f32 %v1195, %v1307
        %1309 = vmatmul.f32.gmra.mxu0 %v502
        %v1310 = vpop.f32.mrf.mxu0
        %v1311 = vadd.f32 %v1198, %v1310
        %1312 = vmatmul.f32.gmra.mxu0 %v503
        %v1313 = vpop.f32.mrf.mxu0
        %v1314 = vadd.f32 %v1201, %v1313
        %1315 = vmatmul.f32.gmra.mxu0 %v504
        %v1316 = vpop.f32.mrf.mxu0
        %v1317 = vadd.f32 %v1204, %v1316
        %1318 = vmatmul.f32.gmra.mxu0 %v505
        %v1319 = vpop.f32.mrf.mxu0
        %v1320 = vadd.f32 %v1207, %v1319
        %1321 = vmatmul.f32.gmra.mxu0 %v506
        %v1322 = vpop.f32.mrf.mxu0
        %v1323 = vadd.f32 %v1210, %v1322
        %1324 = vmatmul.f32.gmra.mxu0 %v507
        %v1325 = vpop.f32.mrf.mxu0
        %v1326 = vadd.f32 %v1213, %v1325
        %1327 = vmatmul.f32.gmra.mxu0 %v508
        %v1328 = vpop.f32.mrf.mxu0
        %v1329 = vadd.f32 %v1216, %v1328
        %1330 = vmatmul.f32.gmra.mxu0 %v509
        %v1331 = vpop.f32.mrf.mxu0
        %v1332 = vadd.f32 %v1219, %v1331
        %1333 = vmatmul.f32.gmra.mxu0 %v510
        %v1334 = vpop.f32.mrf.mxu0
        %v1335 = vadd.f32 %v1222, %v1334
        %1336 = vmatmul.f32.gmra.mxu0 %v511
        %v1337 = vpop.f32.mrf.mxu0
        %v1338 = vadd.f32 %v1225, %v1337
        %1339 = vmatmul.f32.gmra.mxu0 %v512
        %v1340 = vpop.f32.mrf.mxu0
        %v1341 = vadd.f32 %v1228, %v1340
        %1342 = vmatmul.f32.gmra.mxu0 %v513
        %v1343 = vpop.f32.mrf.mxu0
        %v1344 = vadd.f32 %v1231, %v1343
        %1345 = vmatmul.f32.gmra.mxu0 %v514
        %v1346 = vpop.f32.mrf.mxu0
        %v1347 = vadd.f32 %v1234, %v1346
        %1348 = vmatmul.f32.gmra.mxu0 %v515
        %v1349 = vpop.f32.mrf.mxu0
        %v1350 = vadd.f32 %v1237, %v1349
        %1351 = vmatmul.f32.gmra.mxu0 %v516
        %v1352 = vpop.f32.mrf.mxu0
        %v1353 = vadd.f32 %v1240, %v1352
        %1354 = vmatmul.f32.gmra.mxu0 %v517
        %v1355 = vpop.f32.mrf.mxu0
        %v1356 = vadd.f32 %v1243, %v1355
        %1357 = vmatmul.f32.gmra.mxu0 %v518
        %v1358 = vpop.f32.mrf.mxu0
        %v1359 = vadd.f32 %v1246, %v1358
        %1360 = vdwg.mxu0
        %1361 = vmatpush.msra.mxu0 %v743
        %1362 = vmatpush.msra.mxu0 %v742
        %1363 = vmatpush.msra.mxu0 %v741
        %1364 = vmatpush.msra.mxu0 %v740
        %1365 = vmatpush.msra.mxu0 %v739
        %1366 = vmatpush.msra.mxu0 %v738
        %1367 = vmatpush.msra.mxu0 %v737
        %1368 = vmatpush.msra.mxu0 %v736
        %1369 = vmatpush.msra.mxu0 %v735
        %1370 = vmatpush.msra.mxu0 %v734
        %1371 = vmatpush.msra.mxu0 %v733
        %1372 = vmatpush.msra.mxu0 %v732
        %1373 = vmatpush.msra.mxu0 %v731
        %1374 = vmatpush.msra.mxu0 %v730
        %1375 = vmatpush.msra.mxu0 %v729
        %1376 = vmatpush.msra.mxu0 %v728
        %1377 = vmatmul.f32.gmra.mxu0 %v519
        %v1378 = vpop.f32.mrf.mxu0
        %v1379 = vadd.f32 %v1266, %v1378
        %1380 = vmatmul.f32.gmra.mxu0 %v520
        %v1381 = vpop.f32.mrf.mxu0
        %v1382 = vadd.f32 %v1269, %v1381
        %1383 = vmatmul.f32.gmra.mxu0 %v521
        %v1384 = vpop.f32.mrf.mxu0
        %v1385 = vadd.f32 %v1272, %v1384
        %1386 = vmatmul.f32.gmra.mxu0 %v522
        %v1387 = vpop.f32.mrf.mxu0
        %v1388 = vadd.f32 %v1275, %v1387
        %1389 = vmatmul.f32.gmra.mxu0 %v523
        %v1390 = vpop.f32.mrf.mxu0
        %v1391 = vadd.f32 %v1278, %v1390
        %1392 = vmatmul.f32.gmra.mxu0 %v524
        %v1393 = vpop.f32.mrf.mxu0
        %v1394 = vadd.f32 %v1281, %v1393
        %1395 = vmatmul.f32.gmra.mxu0 %v525
        %v1396 = vpop.f32.mrf.mxu0
        %v1397 = vadd.f32 %v1284, %v1396
        %1398 = vmatmul.f32.gmra.mxu0 %v526
        %v1399 = vpop.f32.mrf.mxu0
        %v1400 = vadd.f32 %v1287, %v1399
        %1401 = vmatmul.f32.gmra.mxu0 %v527
        %v1402 = vpop.f32.mrf.mxu0
        %v1403 = vadd.f32 %v1290, %v1402
        %1404 = vmatmul.f32.gmra.mxu0 %v528
        %v1405 = vpop.f32.mrf.mxu0
        %v1406 = vadd.f32 %v1293, %v1405
        %1407 = vmatmul.f32.gmra.mxu0 %v529
        %v1408 = vpop.f32.mrf.mxu0
        %v1409 = vadd.f32 %v1296, %v1408
        %1410 = vmatmul.f32.gmra.mxu0 %v530
        %v1411 = vpop.f32.mrf.mxu0
        %v1412 = vadd.f32 %v1299, %v1411
        %1413 = vmatmul.f32.gmra.mxu0 %v531
        %v1414 = vpop.f32.mrf.mxu0
        %v1415 = vadd.f32 %v1302, %v1414
        %1416 = vmatmul.f32.gmra.mxu0 %v532
        %v1417 = vpop.f32.mrf.mxu0
        %v1418 = vadd.f32 %v1305, %v1417
        %1419 = vmatmul.f32.gmra.mxu0 %v533
        %v1420 = vpop.f32.mrf.mxu0
        %v1421 = vadd.f32 %v1308, %v1420
        %1422 = vmatmul.f32.gmra.mxu0 %v534
        %v1423 = vpop.f32.mrf.mxu0
        %v1424 = vadd.f32 %v1311, %v1423
        %1425 = vmatmul.f32.gmra.mxu0 %v535
        %v1426 = vpop.f32.mrf.mxu0
        %v1427 = vadd.f32 %v1314, %v1426
        %1428 = vmatmul.f32.gmra.mxu0 %v536
        %v1429 = vpop.f32.mrf.mxu0
        %v1430 = vadd.f32 %v1317, %v1429
        %1431 = vmatmul.f32.gmra.mxu0 %v537
        %v1432 = vpop.f32.mrf.mxu0
        %v1433 = vadd.f32 %v1320, %v1432
        %1434 = vmatmul.f32.gmra.mxu0 %v538
        %v1435 = vpop.f32.mrf.mxu0
        %v1436 = vadd.f32 %v1323, %v1435
        %1437 = vmatmul.f32.gmra.mxu0 %v539
        %v1438 = vpop.f32.mrf.mxu0
        %v1439 = vadd.f32 %v1326, %v1438
        %1440 = vmatmul.f32.gmra.mxu0 %v540
        %v1441 = vpop.f32.mrf.mxu0
        %v1442 = vadd.f32 %v1329, %v1441
        %1443 = vmatmul.f32.gmra.mxu0 %v541
        %v1444 = vpop.f32.mrf.mxu0
        %v1445 = vadd.f32 %v1332, %v1444
        %1446 = vmatmul.f32.gmra.mxu0 %v542
        %v1447 = vpop.f32.mrf.mxu0
        %v1448 = vadd.f32 %v1335, %v1447
        %1449 = vmatmul.f32.gmra.mxu0 %v543
        %v1450 = vpop.f32.mrf.mxu0
        %v1451 = vadd.f32 %v1338, %v1450
        %1452 = vmatmul.f32.gmra.mxu0 %v544
        %v1453 = vpop.f32.mrf.mxu0
        %v1454 = vadd.f32 %v1341, %v1453
        %1455 = vmatmul.f32.gmra.mxu0 %v545
        %v1456 = vpop.f32.mrf.mxu0
        %v1457 = vadd.f32 %v1344, %v1456
        %1458 = vmatmul.f32.gmra.mxu0 %v546
        %v1459 = vpop.f32.mrf.mxu0
        %v1460 = vadd.f32 %v1347, %v1459
        %1461 = vmatmul.f32.gmra.mxu0 %v547
        %v1462 = vpop.f32.mrf.mxu0
        %v1463 = vadd.f32 %v1350, %v1462
        %1464 = vmatmul.f32.gmra.mxu0 %v548
        %v1465 = vpop.f32.mrf.mxu0
        %v1466 = vadd.f32 %v1353, %v1465
        %1467 = vmatmul.f32.gmra.mxu0 %v549
        %v1468 = vpop.f32.mrf.mxu0
        %v1469 = vadd.f32 %v1356, %v1468
        %1470 = vmatmul.f32.gmra.mxu0 %v550
        %v1471 = vpop.f32.mrf.mxu0
        %v1472 = vadd.f32 %v1359, %v1471
        %1473 = vdwg.mxu0
        %1474 = vmatpush.msra.mxu0 %v759
        %1475 = vmatpush.msra.mxu0 %v758
        %1476 = vmatpush.msra.mxu0 %v757
        %1477 = vmatpush.msra.mxu0 %v756
        %1478 = vmatpush.msra.mxu0 %v755
        %1479 = vmatpush.msra.mxu0 %v754
        %1480 = vmatpush.msra.mxu0 %v753
        %1481 = vmatpush.msra.mxu0 %v752
        %1482 = vmatpush.msra.mxu0 %v751
        %1483 = vmatpush.msra.mxu0 %v750
        %1484 = vmatpush.msra.mxu0 %v749
        %1485 = vmatpush.msra.mxu0 %v748
        %1486 = vmatpush.msra.mxu0 %v747
        %1487 = vmatpush.msra.mxu0 %v746
        %1488 = vmatpush.msra.mxu0 %v745
        %1489 = vmatpush.msra.mxu0 %v744
        %1490 = vmatmul.f32.gmra.mxu0 %v552
        %v1491 = vpop.f32.mrf.mxu0
        %v1492 = vadd.f32 %v1379, %v1491
        %1493 = vmatmul.f32.gmra.mxu0 %v553
        %v1494 = vpop.f32.mrf.mxu0
        %v1495 = vadd.f32 %v1382, %v1494
        %1496 = vmatmul.f32.gmra.mxu0 %v554
        %v1497 = vpop.f32.mrf.mxu0
        %v1498 = vadd.f32 %v1385, %v1497
        %1499 = vmatmul.f32.gmra.mxu0 %v555
        %v1500 = vpop.f32.mrf.mxu0
        %v1501 = vadd.f32 %v1388, %v1500
        %1502 = vmatmul.f32.gmra.mxu0 %v556
        %v1503 = vpop.f32.mrf.mxu0
        %v1504 = vadd.f32 %v1391, %v1503
        %1505 = vmatmul.f32.gmra.mxu0 %v557
        %v1506 = vpop.f32.mrf.mxu0
        %v1507 = vadd.f32 %v1394, %v1506
        %1508 = vmatmul.f32.gmra.mxu0 %v558
        %v1509 = vpop.f32.mrf.mxu0
        %v1510 = vadd.f32 %v1397, %v1509
        %1511 = vmatmul.f32.gmra.mxu0 %v559
        %v1512 = vpop.f32.mrf.mxu0
        %v1513 = vadd.f32 %v1400, %v1512
        %1514 = vmatmul.f32.gmra.mxu0 %v560
        %v1515 = vpop.f32.mrf.mxu0
        %v1516 = vadd.f32 %v1403, %v1515
        %1517 = vmatmul.f32.gmra.mxu0 %v561
        %v1518 = vpop.f32.mrf.mxu0
        %v1519 = vadd.f32 %v1406, %v1518
        %1520 = vmatmul.f32.gmra.mxu0 %v562
        %v1521 = vpop.f32.mrf.mxu0
        %v1522 = vadd.f32 %v1409, %v1521
        %1523 = vmatmul.f32.gmra.mxu0 %v563
        %v1524 = vpop.f32.mrf.mxu0
        %v1525 = vadd.f32 %v1412, %v1524
        %1526 = vmatmul.f32.gmra.mxu0 %v564
        %v1527 = vpop.f32.mrf.mxu0
        %v1528 = vadd.f32 %v1415, %v1527
        %1529 = vmatmul.f32.gmra.mxu0 %v565
        %v1530 = vpop.f32.mrf.mxu0
        %v1531 = vadd.f32 %v1418, %v1530
        %1532 = vmatmul.f32.gmra.mxu0 %v566
        %v1533 = vpop.f32.mrf.mxu0
        %v1534 = vadd.f32 %v1421, %v1533
        %1535 = vmatmul.f32.gmra.mxu0 %v567
        %v1536 = vpop.f32.mrf.mxu0
        %v1537 = vadd.f32 %v1424, %v1536
        %1538 = vmatmul.f32.gmra.mxu0 %v568
        %v1539 = vpop.f32.mrf.mxu0
        %v1540 = vadd.f32 %v1427, %v1539
        %1541 = vmatmul.f32.gmra.mxu0 %v569
        %v1542 = vpop.f32.mrf.mxu0
        %v1543 = vadd.f32 %v1430, %v1542
        %1544 = vmatmul.f32.gmra.mxu0 %v570
        %v1545 = vpop.f32.mrf.mxu0
        %v1546 = vadd.f32 %v1433, %v1545
        %1547 = vmatmul.f32.gmra.mxu0 %v571
        %v1548 = vpop.f32.mrf.mxu0
        %v1549 = vadd.f32 %v1436, %v1548
        %1550 = vmatmul.f32.gmra.mxu0 %v572
        %v1551 = vpop.f32.mrf.mxu0
        %v1552 = vadd.f32 %v1439, %v1551
        %1553 = vmatmul.f32.gmra.mxu0 %v573
        %v1554 = vpop.f32.mrf.mxu0
        %v1555 = vadd.f32 %v1442, %v1554
        %1556 = vmatmul.f32.gmra.mxu0 %v574
        %v1557 = vpop.f32.mrf.mxu0
        %v1558 = vadd.f32 %v1445, %v1557
        %1559 = vmatmul.f32.gmra.mxu0 %v575
        %v1560 = vpop.f32.mrf.mxu0
        %v1561 = vadd.f32 %v1448, %v1560
        %1562 = vmatmul.f32.gmra.mxu0 %v576
        %v1563 = vpop.f32.mrf.mxu0
        %v1564 = vadd.f32 %v1451, %v1563
        %1565 = vmatmul.f32.gmra.mxu0 %v577
        %v1566 = vpop.f32.mrf.mxu0
        %v1567 = vadd.f32 %v1454, %v1566
        %1568 = vmatmul.f32.gmra.mxu0 %v578
        %v1569 = vpop.f32.mrf.mxu0
        %v1570 = vadd.f32 %v1457, %v1569
        %1571 = vmatmul.f32.gmra.mxu0 %v579
        %v1572 = vpop.f32.mrf.mxu0
        %v1573 = vadd.f32 %v1460, %v1572
        %1574 = vmatmul.f32.gmra.mxu0 %v580
        %v1575 = vpop.f32.mrf.mxu0
        %v1576 = vadd.f32 %v1463, %v1575
        %1577 = vmatmul.f32.gmra.mxu0 %v581
        %v1578 = vpop.f32.mrf.mxu0
        %v1579 = vadd.f32 %v1466, %v1578
        %1580 = vmatmul.f32.gmra.mxu0 %v582
        %v1581 = vpop.f32.mrf.mxu0
        %v1582 = vadd.f32 %v1469, %v1581
        %1583 = vmatmul.f32.gmra.mxu0 %v583
        %v1584 = vpop.f32.mrf.mxu0
        %v1585 = vadd.f32 %v1472, %v1584
        %1586 = vdwg.mxu0
        %1587 = vmatpush.msra.mxu0 %v775
        %1588 = vmatpush.msra.mxu0 %v774
        %1589 = vmatpush.msra.mxu0 %v773
        %1590 = vmatpush.msra.mxu0 %v772
        %1591 = vmatpush.msra.mxu0 %v771
        %1592 = vmatpush.msra.mxu0 %v770
        %1593 = vmatpush.msra.mxu0 %v769
        %1594 = vmatpush.msra.mxu0 %v768
        %1595 = vmatpush.msra.mxu0 %v767
        %1596 = vmatpush.msra.mxu0 %v766
        %1597 = vmatpush.msra.mxu0 %v765
        %1598 = vmatpush.msra.mxu0 %v764
        %1599 = vmatpush.msra.mxu0 %v763
        %1600 = vmatpush.msra.mxu0 %v762
        %1601 = vmatpush.msra.mxu0 %v761
        %1602 = vmatpush.msra.mxu0 %v760
        %1603 = vmatmul.f32.gmra.mxu0 %v584
        %v1604 = vpop.f32.mrf.mxu0
        %v1605 = vadd.f32 %v1492, %v1604
        %1606 = vmatmul.f32.gmra.mxu0 %v585
        %v1607 = vpop.f32.mrf.mxu0
        %v1608 = vadd.f32 %v1495, %v1607
        %1609 = vmatmul.f32.gmra.mxu0 %v586
        %v1610 = vpop.f32.mrf.mxu0
        %v1611 = vadd.f32 %v1498, %v1610
        %1612 = vmatmul.f32.gmra.mxu0 %v587
        %v1613 = vpop.f32.mrf.mxu0
        %v1614 = vadd.f32 %v1501, %v1613
        %1615 = vmatmul.f32.gmra.mxu0 %v588
        %v1616 = vpop.f32.mrf.mxu0
        %v1617 = vadd.f32 %v1504, %v1616
        %1618 = vmatmul.f32.gmra.mxu0 %v589
        %v1619 = vpop.f32.mrf.mxu0
        %v1620 = vadd.f32 %v1507, %v1619
        %1621 = vmatmul.f32.gmra.mxu0 %v590
        %v1622 = vpop.f32.mrf.mxu0
        %v1623 = vadd.f32 %v1510, %v1622
        %1624 = vmatmul.f32.gmra.mxu0 %v591
        %v1625 = vpop.f32.mrf.mxu0
        %v1626 = vadd.f32 %v1513, %v1625
        %1627 = vmatmul.f32.gmra.mxu0 %v592
        %v1628 = vpop.f32.mrf.mxu0
        %v1629 = vadd.f32 %v1516, %v1628
        %1630 = vmatmul.f32.gmra.mxu0 %v593
        %v1631 = vpop.f32.mrf.mxu0
        %v1632 = vadd.f32 %v1519, %v1631
        %1633 = vmatmul.f32.gmra.mxu0 %v594
        %v1634 = vpop.f32.mrf.mxu0
        %v1635 = vadd.f32 %v1522, %v1634
        %1636 = vmatmul.f32.gmra.mxu0 %v595
        %v1637 = vpop.f32.mrf.mxu0
        %v1638 = vadd.f32 %v1525, %v1637
        %1639 = vmatmul.f32.gmra.mxu0 %v596
        %v1640 = vpop.f32.mrf.mxu0
        %v1641 = vadd.f32 %v1528, %v1640
        %1642 = vmatmul.f32.gmra.mxu0 %v597
        %v1643 = vpop.f32.mrf.mxu0
        %v1644 = vadd.f32 %v1531, %v1643
        %1645 = vmatmul.f32.gmra.mxu0 %v598
        %v1646 = vpop.f32.mrf.mxu0
        %v1647 = vadd.f32 %v1534, %v1646
        %1648 = vmatmul.f32.gmra.mxu0 %v599
        %v1649 = vpop.f32.mrf.mxu0
        %v1650 = vadd.f32 %v1537, %v1649
        %1651 = vmatmul.f32.gmra.mxu0 %v600
        %v1652 = vpop.f32.mrf.mxu0
        %v1653 = vadd.f32 %v1540, %v1652
        %1654 = vmatmul.f32.gmra.mxu0 %v601
        %v1655 = vpop.f32.mrf.mxu0
        %v1656 = vadd.f32 %v1543, %v1655
        %1657 = vmatmul.f32.gmra.mxu0 %v602
        %v1658 = vpop.f32.mrf.mxu0
        %v1659 = vadd.f32 %v1546, %v1658
        %1660 = vmatmul.f32.gmra.mxu0 %v603
        %v1661 = vpop.f32.mrf.mxu0
        %v1662 = vadd.f32 %v1549, %v1661
        %1663 = vmatmul.f32.gmra.mxu0 %v604
        %v1664 = vpop.f32.mrf.mxu0
        %v1665 = vadd.f32 %v1552, %v1664
        %1666 = vmatmul.f32.gmra.mxu0 %v605
        %v1667 = vpop.f32.mrf.mxu0
        %v1668 = vadd.f32 %v1555, %v1667
        %1669 = vmatmul.f32.gmra.mxu0 %v606
        %v1670 = vpop.f32.mrf.mxu0
        %v1671 = vadd.f32 %v1558, %v1670
        %1672 = vmatmul.f32.gmra.mxu0 %v607
        %v1673 = vpop.f32.mrf.mxu0
        %v1674 = vadd.f32 %v1561, %v1673
        %1675 = vmatmul.f32.gmra.mxu0 %v608
        %v1676 = vpop.f32.mrf.mxu0
        %v1677 = vadd.f32 %v1564, %v1676
        %1678 = vmatmul.f32.gmra.mxu0 %v609
        %v1679 = vpop.f32.mrf.mxu0
        %v1680 = vadd.f32 %v1567, %v1679
        %1681 = vmatmul.f32.gmra.mxu0 %v610
        %v1682 = vpop.f32.mrf.mxu0
        %v1683 = vadd.f32 %v1570, %v1682
        %1684 = vmatmul.f32.gmra.mxu0 %v611
        %v1685 = vpop.f32.mrf.mxu0
        %v1686 = vadd.f32 %v1573, %v1685
        %1687 = vmatmul.f32.gmra.mxu0 %v612
        %v1688 = vpop.f32.mrf.mxu0
        %v1689 = vadd.f32 %v1576, %v1688
        %1690 = vmatmul.f32.gmra.mxu0 %v613
        %v1691 = vpop.f32.mrf.mxu0
        %v1692 = vadd.f32 %v1579, %v1691
        %1693 = vmatmul.f32.gmra.mxu0 %v614
        %v1694 = vpop.f32.mrf.mxu0
        %v1695 = vadd.f32 %v1582, %v1694
        %1696 = vmatmul.f32.gmra.mxu0 %v615
        %v1697 = vpop.f32.mrf.mxu0
        %v1698 = vadd.f32 %v1585, %v1697
        %1699 = vdwg.mxu0
        %1700 = vmatpush.msra.mxu0 %v791
        %1701 = vmatpush.msra.mxu0 %v790
        %1702 = vmatpush.msra.mxu0 %v789
        %1703 = vmatpush.msra.mxu0 %v788
        %1704 = vmatpush.msra.mxu0 %v787
        %1705 = vmatpush.msra.mxu0 %v786
        %1706 = vmatpush.msra.mxu0 %v785
        %1707 = vmatpush.msra.mxu0 %v784
        %1708 = vmatpush.msra.mxu0 %v783
        %1709 = vmatpush.msra.mxu0 %v782
        %1710 = vmatpush.msra.mxu0 %v781
        %1711 = vmatpush.msra.mxu0 %v780
        %1712 = vmatpush.msra.mxu0 %v779
        %1713 = vmatpush.msra.mxu0 %v778
        %1714 = vmatpush.msra.mxu0 %v777
        %1715 = vmatpush.msra.mxu0 %v776
        %1716 = vmatmul.f32.gmra.mxu0 %v616
        %v1717 = vpop.f32.mrf.mxu0
        %v1718 = vadd.f32 %v1605, %v1717
        %1719 = vmatmul.f32.gmra.mxu0 %v617
        %v1720 = vpop.f32.mrf.mxu0
        %v1721 = vadd.f32 %v1608, %v1720
        %1722 = vmatmul.f32.gmra.mxu0 %v618
        %v1723 = vpop.f32.mrf.mxu0
        %v1724 = vadd.f32 %v1611, %v1723
        %1725 = vmatmul.f32.gmra.mxu0 %v619
        %v1726 = vpop.f32.mrf.mxu0
        %v1727 = vadd.f32 %v1614, %v1726
        %1728 = vmatmul.f32.gmra.mxu0 %v620
        %v1729 = vpop.f32.mrf.mxu0
        %v1730 = vadd.f32 %v1617, %v1729
        %1731 = vmatmul.f32.gmra.mxu0 %v621
        %v1732 = vpop.f32.mrf.mxu0
        %v1733 = vadd.f32 %v1620, %v1732
        %1734 = vmatmul.f32.gmra.mxu0 %v622
        %v1735 = vpop.f32.mrf.mxu0
        %v1736 = vadd.f32 %v1623, %v1735
        %1737 = vmatmul.f32.gmra.mxu0 %v623
        %v1738 = vpop.f32.mrf.mxu0
        %v1739 = vadd.f32 %v1626, %v1738
        %1740 = vmatmul.f32.gmra.mxu0 %v624
        %v1741 = vpop.f32.mrf.mxu0
        %v1742 = vadd.f32 %v1629, %v1741
        %1743 = vmatmul.f32.gmra.mxu0 %v625
        %v1744 = vpop.f32.mrf.mxu0
        %v1745 = vadd.f32 %v1632, %v1744
        %1746 = vmatmul.f32.gmra.mxu0 %v626
        %v1747 = vpop.f32.mrf.mxu0
        %v1748 = vadd.f32 %v1635, %v1747
        %1749 = vmatmul.f32.gmra.mxu0 %v627
        %v1750 = vpop.f32.mrf.mxu0
        %v1751 = vadd.f32 %v1638, %v1750
        %1752 = vmatmul.f32.gmra.mxu0 %v628
        %v1753 = vpop.f32.mrf.mxu0
        %v1754 = vadd.f32 %v1641, %v1753
        %1755 = vmatmul.f32.gmra.mxu0 %v629
        %v1756 = vpop.f32.mrf.mxu0
        %v1757 = vadd.f32 %v1644, %v1756
        %1758 = vmatmul.f32.gmra.mxu0 %v630
        %v1759 = vpop.f32.mrf.mxu0
        %v1760 = vadd.f32 %v1647, %v1759
        %1761 = vmatmul.f32.gmra.mxu0 %v631
        %v1762 = vpop.f32.mrf.mxu0
        %v1763 = vadd.f32 %v1650, %v1762
        %1764 = vmatmul.f32.gmra.mxu0 %v632
        %v1765 = vpop.f32.mrf.mxu0
        %v1766 = vadd.f32 %v1653, %v1765
        %1767 = vmatmul.f32.gmra.mxu0 %v633
        %v1768 = vpop.f32.mrf.mxu0
        %v1769 = vadd.f32 %v1656, %v1768
        %1770 = vmatmul.f32.gmra.mxu0 %v634
        %v1771 = vpop.f32.mrf.mxu0
        %v1772 = vadd.f32 %v1659, %v1771
        %1773 = vmatmul.f32.gmra.mxu0 %v635
        %v1774 = vpop.f32.mrf.mxu0
        %v1775 = vadd.f32 %v1662, %v1774
        %1776 = vmatmul.f32.gmra.mxu0 %v636
        %v1777 = vpop.f32.mrf.mxu0
        %v1778 = vadd.f32 %v1665, %v1777
        %1779 = vmatmul.f32.gmra.mxu0 %v637
        %v1780 = vpop.f32.mrf.mxu0
        %v1781 = vadd.f32 %v1668, %v1780
        %1782 = vmatmul.f32.gmra.mxu0 %v638
        %v1783 = vpop.f32.mrf.mxu0
        %v1784 = vadd.f32 %v1671, %v1783
        %1785 = vmatmul.f32.gmra.mxu0 %v639
        %v1786 = vpop.f32.mrf.mxu0
        %v1787 = vadd.f32 %v1674, %v1786
        %1788 = vmatmul.f32.gmra.mxu0 %v640
        %v1789 = vpop.f32.mrf.mxu0
        %v1790 = vadd.f32 %v1677, %v1789
        %1791 = vmatmul.f32.gmra.mxu0 %v641
        %v1792 = vpop.f32.mrf.mxu0
        %v1793 = vadd.f32 %v1680, %v1792
        %1794 = vmatmul.f32.gmra.mxu0 %v642
        %v1795 = vpop.f32.mrf.mxu0
        %v1796 = vadd.f32 %v1683, %v1795
        %1797 = vmatmul.f32.gmra.mxu0 %v643
        %v1798 = vpop.f32.mrf.mxu0
        %v1799 = vadd.f32 %v1686, %v1798
        %1800 = vmatmul.f32.gmra.mxu0 %v644
        %v1801 = vpop.f32.mrf.mxu0
        %v1802 = vadd.f32 %v1689, %v1801
        %1803 = vmatmul.f32.gmra.mxu0 %v645
        %v1804 = vpop.f32.mrf.mxu0
        %v1805 = vadd.f32 %v1692, %v1804
        %1806 = vmatmul.f32.gmra.mxu0 %v646
        %v1807 = vpop.f32.mrf.mxu0
        %v1808 = vadd.f32 %v1695, %v1807
        %1809 = vmatmul.f32.gmra.mxu0 %v647
        %v1810 = vpop.f32.mrf.mxu0
        %v1811 = vadd.f32 %v1698, %v1810
        %1812 = vdwg.mxu0
        %1813 = vst [vmem:[%s234] sm:$0xff] %v1718
        %1814 = vst [vmem:[%s234 + $0x8] sm:$0xff] %v1721
        %1815 = vst [vmem:[%s234 + $0x10] sm:$0xff] %v1724
        %1816 = vst [vmem:[%s234 + $0x18] sm:$0xff] %v1727
        %1817 = vst [vmem:[%s234 + $0x20] sm:$0xff] %v1730
        %1818 = vst [vmem:[%s234 + $0x28] sm:$0xff] %v1733
        %1819 = vst [vmem:[%s234 + $0x30] sm:$0xff] %v1736
        %1820 = vst [vmem:[%s234 + $0x38] sm:$0xff] %v1739
        %1821 = vst [vmem:[%s234 + $0x40] sm:$0xff] %v1742
        %1822 = vst [vmem:[%s234 + $0x48] sm:$0xff] %v1745
        %1823 = vst [vmem:[%s234 + $0x50] sm:$0xff] %v1748
        %1824 = vst [vmem:[%s234 + $0x58] sm:$0xff] %v1751
        %1825 = vst [vmem:[%s234 + $0x60] sm:$0xff] %v1754
        %1826 = vst [vmem:[%s234 + $0x68] sm:$0xff] %v1757
        %1827 = vst [vmem:[%s234 + $0x70] sm:$0xff] %v1760
        %1828 = vst [vmem:[%s234 + $0x78] sm:$0xff] %v1763
        %1829 = vst [vmem:[%s234 + $0x80] sm:$0xff] %v1766
        %1830 = vst [vmem:[%s234 + $0x88] sm:$0xff] %v1769
        %1831 = vst [vmem:[%s234 + $0x90] sm:$0xff] %v1772
        %1832 = vst [vmem:[%s234 + $0x98] sm:$0xff] %v1775
        %1833 = vst [vmem:[%s234 + $0xa0] sm:$0xff] %v1778
        %1834 = vst [vmem:[%s234 + $0xa8] sm:$0xff] %v1781
        %1835 = vst [vmem:[%s234 + $0xb0] sm:$0xff] %v1784
        %1836 = vst [vmem:[%s234 + $0xb8] sm:$0xff] %v1787
        %1837 = vst [vmem:[%s234 + $0xc0] sm:$0xff] %v1790
        %1838 = vst [vmem:[%s234 + $0xc8] sm:$0xff] %v1793
        %1839 = vst [vmem:[%s234 + $0xd0] sm:$0xff] %v1796
        %1840 = vst [vmem:[%s234 + $0xd8] sm:$0xff] %v1799
        %1841 = vst [vmem:[%s234 + $0xe0] sm:$0xff] %v1802
        %1842 = vst [vmem:[%s234 + $0xe8] sm:$0xff] %v1805
        %1843 = vst [vmem:[%s234 + $0xf0] sm:$0xff] %v1808
        %1844 = vst [vmem:[%s234 + $0xf8] sm:$0xff] %v1811
        %v1845 = vadd.f32 %v1718, %v1721
        %v1846 = vadd.f32 %v1845, %v1724
        %v1847 = vadd.f32 %v1846, %v1727
        %v1848 = vadd.f32 %v1847, %v1730
        %v1849 = vadd.f32 %v1848, %v1733
        %v1850 = vadd.f32 %v1849, %v1736
        %v1851 = vadd.f32 %v1850, %v1739
        %v1852 = vadd.f32 %v1851, %v1742
        %v1853 = vadd.f32 %v1852, %v1745
        %v1854 = vadd.f32 %v1853, %v1748
        %v1855 = vadd.f32 %v1854, %v1751
        %v1856 = vadd.f32 %v1855, %v1754
        %v1857 = vadd.f32 %v1856, %v1757
        %v1858 = vadd.f32 %v1857, %v1760
        %v1859 = vadd.f32 %v1858, %v1763
        %v1860 = vadd.f32 %v1859, %v1766
        %v1861 = vadd.f32 %v1860, %v1769
        %v1862 = vadd.f32 %v1861, %v1772
        %v1863 = vadd.f32 %v1862, %v1775
        %v1864 = vadd.f32 %v1863, %v1778
        %v1865 = vadd.f32 %v1864, %v1781
        %v1866 = vadd.f32 %v1865, %v1784
        %v1867 = vadd.f32 %v1866, %v1787
        %v1868 = vadd.f32 %v1867, %v1790
        %v1869 = vadd.f32 %v1868, %v1793
        %v1870 = vadd.f32 %v1869, %v1796
        %v1871 = vadd.f32 %v1870, %v1799
        %v1872 = vadd.f32 %v1871, %v1802
        %v1873 = vadd.f32 %v1872, %v1805
        %v1874 = vadd.f32 %v1873, %v1808
        %v1875 = vadd.f32 %v1874, %v1811
        %v1876 = vrot.slane %v1875, 4
        %v1877 = vadd.f32 %v1875, %v1876
        %v1878 = vrot.slane %v1877, 2
        %v1879 = vadd.f32 %v1877, %v1878
        %v1880 = vrot.slane %v1879, 1
        %v1881 = vadd.f32 %v1879, %v1880
        %v1882 = vmul.f32 %v1718, %v1718
        %v1883 = vmul.f32 %v1721, %v1721
        %v1884 = vmul.f32 %v1724, %v1724
        %v1885 = vmul.f32 %v1727, %v1727
        %v1886 = vmul.f32 %v1730, %v1730
        %v1887 = vmul.f32 %v1733, %v1733
        %v1888 = vmul.f32 %v1736, %v1736
        %v1889 = vmul.f32 %v1739, %v1739
        %v1890 = vmul.f32 %v1742, %v1742
        %v1891 = vmul.f32 %v1745, %v1745
        %v1892 = vmul.f32 %v1748, %v1748
        %v1893 = vmul.f32 %v1751, %v1751
        %v1894 = vmul.f32 %v1754, %v1754
        %v1895 = vmul.f32 %v1757, %v1757
        %v1896 = vmul.f32 %v1760, %v1760
        %v1897 = vmul.f32 %v1763, %v1763
        %v1898 = vmul.f32 %v1766, %v1766
        %v1899 = vmul.f32 %v1769, %v1769
        %v1900 = vmul.f32 %v1772, %v1772
        %v1901 = vmul.f32 %v1775, %v1775
        %v1902 = vmul.f32 %v1778, %v1778
        %v1903 = vmul.f32 %v1781, %v1781
        %v1904 = vmul.f32 %v1784, %v1784
        %v1905 = vmul.f32 %v1787, %v1787
        %v1906 = vmul.f32 %v1790, %v1790
        %v1907 = vmul.f32 %v1793, %v1793
        %v1908 = vmul.f32 %v1796, %v1796
        %v1909 = vmul.f32 %v1799, %v1799
        %v1910 = vmul.f32 %v1802, %v1802
        %v1911 = vmul.f32 %v1805, %v1805
        %v1912 = vmul.f32 %v1808, %v1808
        %v1913 = vmul.f32 %v1811, %v1811
        %v1914 = vadd.f32 %v1882, %v1883
        %v1915 = vadd.f32 %v1914, %v1884
        %v1916 = vadd.f32 %v1915, %v1885
        %v1917 = vadd.f32 %v1916, %v1886
        %v1918 = vadd.f32 %v1917, %v1887
        %v1919 = vadd.f32 %v1918, %v1888
        %v1920 = vadd.f32 %v1919, %v1889
        %v1921 = vadd.f32 %v1920, %v1890
        %v1922 = vadd.f32 %v1921, %v1891
        %v1923 = vadd.f32 %v1922, %v1892
        %v1924 = vadd.f32 %v1923, %v1893
        %v1925 = vadd.f32 %v1924, %v1894
        %v1926 = vadd.f32 %v1925, %v1895
        %v1927 = vadd.f32 %v1926, %v1896
        %v1928 = vadd.f32 %v1927, %v1897
        %v1929 = vadd.f32 %v1928, %v1898
        %v1930 = vadd.f32 %v1929, %v1899
        %v1931 = vadd.f32 %v1930, %v1900
        %v1932 = vadd.f32 %v1931, %v1901
        %v1933 = vadd.f32 %v1932, %v1902
        %v1934 = vadd.f32 %v1933, %v1903
        %v1935 = vadd.f32 %v1934, %v1904
        %v1936 = vadd.f32 %v1935, %v1905
        %v1937 = vadd.f32 %v1936, %v1906
        %v1938 = vadd.f32 %v1937, %v1907
        %v1939 = vadd.f32 %v1938, %v1908
        %v1940 = vadd.f32 %v1939, %v1909
        %v1941 = vadd.f32 %v1940, %v1910
        %v1942 = vadd.f32 %v1941, %v1911
        %v1943 = vadd.f32 %v1942, %v1912
        %v1944 = vadd.f32 %v1943, %v1913
        %v1945 = vrot.slane %v1944, 4
        %v1946 = vadd.f32 %v1944, %v1945
        %v1947 = vrot.slane %v1946, 2
        %v1948 = vadd.f32 %v1946, %v1947
        %v1949 = vrot.slane %v1948, 1
        %v1950 = vadd.f32 %v1948, %v1949
        %v1951 = vld [vmem:[%s4] sm:$0x3]
        %vm1952 = vcmask 1040384
        %v1953 = vsel %vm1952, %v1881, %v1950
        %v1954 = vadd.f32 %v1951, %v1953
        %1955 = vst [vmem:[%s4] sm:$0x3] %v1954
        %p1956 = scmp.lt.s32.totalorder %s20, 1
        %s1957 = scalar_select %p1956, %s20, 1
        %s1958 = smul.addr %s1957, 32
        %s1959 = smul.addr %s1958, 8
        %s1960 = scalar_lea.vmem %s3, %s1959
        // Predicated region
        $region45: #{anchor_free_forward.2} parent=31 // pred_check
          %p1961 = pneg %p106
        $region46: #{anchor_free_forward.2} parent=31 // pred_check_branch
          %1963 = sbr.rel (%p1961) target = $region48
        $region47: #{anchor_free_forward.2} parent=31 // pred_region
          _
        $region48: #{anchor_free_forward.2} parent=31 // pred_fallthru
          _
        // Predicated region
        $region49: #{anchor_free_forward.2} parent=31 // pred_check
          %p1964 = pneg %p127
        $region50: #{anchor_free_forward.2} parent=31 // pred_check_branch
          %1966 = sbr.rel (%p1964) target = $region52
        $region51: #{anchor_free_forward.2} parent=31 // pred_region
          _
        $region52: #{anchor_free_forward.2} parent=31 // pred_fallthru
          _
        // Predicated region
        $region53: #{anchor_free_forward.2} parent=31 // pred_check
          %p1967 = pneg %p127
        $region54: #{anchor_free_forward.2} parent=31 // pred_check_branch
          %1969 = sbr.rel (%p1967) target = $region56
        $region55: #{anchor_free_forward.2} parent=31 // pred_region
          _
        $region56: #{anchor_free_forward.2} parent=31 // pred_fallthru
          _
      $region32: #{anchor_free_forward.2} parent=5 // pred_fallthru
        _
      %p1970 = scmp.le.s32.totalorder 2, %s15
      // Predicated region
      $region57: #{anchor_free_forward.2} parent=5 // pred_check
        %p1971 = pneg %p1970
      $region58: #{anchor_free_forward.2} parent=5 // pred_check_branch
        %1973 = sbr.rel (%p1971) target = $region60
      $region59: #{anchor_free_forward.2} parent=5 // pred_region
        %s1974 = ssub.s32 %s15, 2
        // Predicated region
        $region61: #{anchor_free_forward.2} parent=59 // pred_check
          %p1975 = pneg %p112
        $region62: #{anchor_free_forward.2} parent=59 // pred_check_branch
          %1977 = sbr.rel (%p1975) target = $region64
        $region63: #{anchor_free_forward.2} parent=59 // pred_region
          %p1978 = scmp.lt.s32.totalorder %s21, 1
          %s1979 = scalar_select %p1978, %s21, 1
          %s1980 = smul.addr %s1979, 32
          %s1981 = smul.addr %s1980, 8
          %s1982 = scalar_lea.vmem %s3, %s1981
        $region64: #{anchor_free_forward.2} parent=59 // pred_fallthru
          _
      $region60: #{anchor_free_forward.2} parent=5 // pred_fallthru
        _
    $region6: #{anchor_free_forward.2} parent=1 // loop_footer
      %s19 = sadd.s32 1, %s15
    $region7: #{anchor_free_forward.2} parent=1 // loop_footer_branch
      %14 = sbr.rel target = $region3
    $region8: #{anchor_free_forward.2} parent=1 // loop_exit
      _
    %1983 = vsyncpa [#allocation4], 1
    %s1984 = scalar_lea.sflag [#allocation4], 1
    %1985 = vsyncpa %s1984, 1
    %1986 = vsyncpa [#allocation6], 1

</llo_original>
